<compile_context>
chip_gen: v7x
topology: tpu7x:2x2x1
jax: 0.10.0
libtpu: 0.0.40
codegen_flags: <defaults>
</compile_context>

<pallas_src>
import functools

import jax
import jax.numpy as jnp
from jax import lax
from jax.experimental import pallas as pl
from jax.experimental.pallas import tpu as pltpu

EPS = 1e-5
KSIZE = 3       # stem conv kernel size
LANE = 128      # TPU lane width — output segments start on 128-lane boundaries


def _round8(n):
    return (n + 7) // 8 * 8


def _round16(n):
    return (n + 15) // 16 * 16


def _w_layout(ck, prev_dim, dim, pred_dim):
    """Row offsets of each weight block inside the packed (rows, 128) f32 weight slab."""
    offs, r = {}, 0
    for name, rows in (("stem", ck),
                       ("w1", prev_dim),
                       ("w2", 2 * prev_dim),
                       ("w3", prev_dim + prev_dim // 2),
                       ("pr1", dim),
                       ("pr2", pred_dim)):
        offs[name] = r
        r = _round8(r + rows)
    return offs, r


# ---------------- in-kernel helpers ----------------


def _bn_stats(y):
    """Single-pass, row-0-shifted batch moments: ONE reduction over [yc | yc*yc]."""
    n = y.shape[-1]
    y0 = y[0:1, :]
    yc = y - y0
    s = jnp.mean(jnp.concatenate([yc, yc * yc], axis=-1), axis=0, keepdims=True)
    mc, msc = s[:, :n], s[:, n:]
    return mc + y0, jnp.maximum(msc - mc * mc, 0.0)


def _bn_relu(y, g, b):
    m, v = _bn_stats(y)
    return jnp.maximum((y - m) * lax.rsqrt(v + EPS) * g + b, 0.0)


# ---------------- fused forward kernel ----------------


def _fused_forward_kernel(patches_ref, w_ref, v_ref, out_ref, *,
                          batch, spatial, ck, prev_dim, dim, pred_dim, n_classes, offs):
    f32 = jnp.float32
    pd = prev_dim
    nh2 = prev_dim + prev_dim // 2
    ncls = n_classes

    # ---- encoder stem: conv3x3 as im2col matmul (bf16 x bf16 operands, f32 accumulate) ----
    stem_w = w_ref[offs["stem"]:offs["stem"] + ck, 0:pd].astype(jnp.bfloat16)
    y = jnp.dot(patches_ref[...], stem_w, preferred_element_type=f32)      # (B*H*W, pd)

    # BatchNorm2d (batch stats over B*H*W) + ReLU — single-pass moments
    m, var = _bn_stats(y)
    y = jnp.maximum((y - m) * lax.rsqrt(var + EPS) * v_ref[0:1, 0:pd] + v_ref[1:2, 0:pd], 0.0)

    # AdaptiveAvgPool2d((1,1)): one MXU matmul with an iota-built block-averaging matrix
    r = lax.broadcasted_iota(jnp.int32, (batch, batch * spatial), 0)
    c = lax.broadcasted_iota(jnp.int32, (batch, batch * spatial), 1)
    lo = r * spatial
    pool = jnp.where((c >= lo) & (c < lo + spatial), 1.0 / spatial, 0.0).astype(f32)
    feat = jnp.dot(pool, y, preferred_element_type=f32)                    # (B, pd)

    # ---- fc[0] (+) classifier[0]: Linear(no bias) -> BN -> ReLU, fused on concatenated cols ----
    h1 = _bn_relu(jnp.dot(feat, w_ref[offs["w1"]:offs["w1"] + pd, 0:2 * pd],
                          preferred_element_type=f32),
                  v_ref[2:3, 0:2 * pd], v_ref[3:4, 0:2 * pd])              # (B, 2*pd)

    # ---- fc[4] (+) classifier[4]: block-diagonal Linear -> BN -> ReLU ----
    h2 = _bn_relu(jnp.dot(h1, w_ref[offs["w2"]:offs["w2"] + 2 * pd, 0:nh2],
                          preferred_element_type=f32),
                  v_ref[4:5, 0:nh2], v_ref[5:6, 0:nh2])                    # (B, pd + pd//2)

    # ---- fc[7] (+) classifier[7]: block-diagonal Linear ----
    # (fc[7] bias omitted: cancelled exactly by the affine-free BatchNorm1d that follows)
    o3 = jnp.dot(h2, w_ref[offs["w3"]:offs["w3"] + nh2, 0:dim + ncls],
                 preferred_element_type=f32) + v_ref[9:10, 0:dim + ncls]   # (B, dim + ncls)
    z_pre = o3[:, :dim]
    cls = o3[:, dim:dim + ncls]

    # fc[8]: BatchNorm1d(dim, affine=False)
    zm, zv = _bn_stats(z_pre)
    z1 = (z_pre - zm) * lax.rsqrt(zv + EPS)

    # ---- predictor ----
    q = _bn_relu(jnp.dot(z1, w_ref[offs["pr1"]:offs["pr1"] + dim, 0:pred_dim],
                         preferred_element_type=f32),
                 v_ref[6:7, 0:pred_dim], v_ref[7:8, 0:pred_dim])           # (B, pred_dim)
    p1 = jnp.dot(q, w_ref[offs["pr2"]:offs["pr2"] + pred_dim, 0:dim],
                 preferred_element_type=f32) + v_ref[8:9, 0:dim]           # (B, dim)

    # ---- lane-aligned output stores: p1 | z1 | cls each start on a 128-lane boundary ----
    out_ref[...] = jnp.zeros_like(out_ref)
    out_ref[:, 0:dim] = p1
    out_ref[:, LANE:LANE + dim] = z1
    out_ref[:, 2 * LANE:2 * LANE + ncls] = cls


# ---------------- wrapper-side im2col (unpadded) ----------------


def _im2col(x, k=KSIZE):
    """(B,C,H,W) NCHW -> (B*H*W, C*k*k) 'same'-padded stride-1 patches (no lane padding)."""
    B, C, H, W = x.shape
    p = k // 2
    xh = jnp.transpose(x, (0, 2, 3, 1))                                    # NHWC
    xh = jnp.pad(xh, ((0, 0), (p, p), (p, p), (0, 0)))
    cols = [xh[:, dh:dh + H, dw:dw + W, :] for dh in range(k) for dw in range(k)]
    return jnp.concatenate(cols, axis=-1).reshape(B * H * W, C * k * k)


# ---------------- parameters ----------------


def init_params(key, *, in_ch=4, prev_dim=32, dim=64, pred_dim=16, n_classes=10, k=KSIZE):
    ks = jax.random.split(key, 9)
    w = lambda kk, shape, s=0.1: jax.random.normal(kk, shape, jnp.float32) * s
    ones = lambda n: jnp.ones((n,), jnp.float32)
    zeros = lambda n: jnp.zeros((n,), jnp.float32)
    ckk = in_ch * k * k
    return dict(
        # encoder stem (stand-in backbone)
        stem_w=w(ks[0], (ckk, prev_dim)), stem_g=ones(prev_dim), stem_b=zeros(prev_dim),
        # fc[0] / classifier[0] (both consume `feat`)
        fc_w1=w(ks[1], (prev_dim, prev_dim)), fc_g1=ones(prev_dim), fc_b1=zeros(prev_dim),
        cl_w1=w(ks[2], (prev_dim, prev_dim)), cl_g1=ones(prev_dim), cl_b1=zeros(prev_dim),
        # fc[4] / classifier[4]
        fc_w2=w(ks[3], (prev_dim, prev_dim)), fc_g2=ones(prev_dim), fc_b2=zeros(prev_dim),
        cl_w2=w(ks[4], (prev_dim, prev_dim // 2)),
        cl_g2=ones(prev_dim // 2), cl_b2=zeros(prev_dim // 2),
        # fc[7] / classifier[7]   (fc[7] bias dropped: cancelled by affine-free BatchNorm1d)
        fc_w3=w(ks[5], (prev_dim, dim)),
        cl_w3=w(ks[6], (prev_dim // 2, n_classes)), cl_b3=zeros(n_classes),
        # predictor
        pr_w1=w(ks[7], (dim, pred_dim)), pr_g1=ones(pred_dim), pr_b1=zeros(pred_dim),
        pr_w2=w(ks[8], (pred_dim, dim)), pr_b2=zeros(dim),
    )


def pack_params(p, *, in_ch=4, prev_dim=32, dim=64, pred_dim=16, n_classes=10, k=KSIZE):
    """Pack all weights / BN params into two (8,128)-aligned f32 slabs (done once, off-line)."""
    ckk = in_ch * k * k
    ck = _round16(ckk)                      # conv contraction rows, rounded for bf16 tiling
    offs, w_rows = _w_layout(ck, prev_dim, dim, pred_dim)
    pd, nh2 = prev_dim, prev_dim + prev_dim // 2

    wsl = jnp.zeros((w_rows, LANE), jnp.float32)
    wsl = wsl.at[offs["stem"]:offs["stem"] + ckk, :pd].set(p["stem_w"])
    wsl = wsl.at[offs["w1"]:offs["w1"] + pd, :2 * pd].set(
        jnp.concatenate([p["fc_w1"], p["cl_w1"]], axis=1))
    # block-diagonal fc[4] (+) classifier[4]
    wsl = wsl.at[offs["w2"]:offs["w2"] + pd, :pd].set(p["fc_w2"])
    wsl = wsl.at[offs["w2"] + pd:offs["w2"] + 2 * pd, pd:nh2].set(p["cl_w2"])
    # block-diagonal fc[7] (+) classifier[7]
    wsl = wsl.at[offs["w3"]:offs["w3"] + pd, :dim].set(p["fc_w3"])
    wsl = wsl.at[offs["w3"] + pd:offs["w3"] + nh2, dim:dim + n_classes].set(p["cl_w3"])
    wsl = wsl.at[offs["pr1"]:offs["pr1"] + dim, :pred_dim].set(p["pr_w1"])
    wsl = wsl.at[offs["pr2"]:offs["pr2"] + pred_dim, :dim].set(p["pr_w2"])

    vsl = jnp.zeros((16, LANE), jnp.float32)
    vsl = vsl.at[0, :pd].set(p["stem_g"])
    vsl = vsl.at[1, :pd].set(p["stem_b"])
    vsl = vsl.at[2, :2 * pd].set(jnp.concatenate([p["fc_g1"], p["cl_g1"]]))
    vsl = vsl.at[3, :2 * pd].set(jnp.concatenate([p["fc_b1"], p["cl_b1"]]))
    vsl = vsl.at[4, :nh2].set(jnp.concatenate([p["fc_g2"], p["cl_g2"]]))
    vsl = vsl.at[5, :nh2].set(jnp.concatenate([p["fc_b2"], p["cl_b2"]]))
    vsl = vsl.at[6, :pred_dim].set(p["pr_g1"])
    vsl = vsl.at[7, :pred_dim].set(p["pr_b1"])
    vsl = vsl.at[8, :dim].set(p["pr_b2"])
    vsl = vsl.at[9, dim:dim + n_classes].set(p["cl_b3"])
    return dict(w_slab=wsl, v_slab=vsl)


# ---------------- forward ----------------


@functools.partial(jax.jit, static_argnames=("prev_dim", "dim", "pred_dim", "n_classes"))
def simsiam_v2ce_forward(packed, x, *, prev_dim=32, dim=64, pred_dim=16, n_classes=10):
    B, C, H, W = x.shape
    ckk = C * KSIZE * KSIZE
    ck = _round16(ckk)
    offs, _ = _w_layout(ck, prev_dim, dim, pred_dim)
    nh2 = prev_dim + prev_dim // 2

    # Unpadded im2col, bf16 cast at the kernel boundary (BN / elementwise stay f32 in-kernel).
    patches = _im2col(x)
    patches = jnp.pad(patches, ((0, 0), (0, ck - ckk))).astype(jnp.bfloat16)   # (B*H*W, ck)

    flops = 2 * (B * H * W * ck * prev_dim                 # stem conv matmul
                 + B * (B * H * W) * prev_dim              # avg-pool matmul
                 + B * prev_dim * 2 * prev_dim             # fused fc[0]/classifier[0]
                 + B * 2 * prev_dim * nh2                  # block-diag fc[4]/classifier[4]
                 + B * nh2 * (dim + n_classes)             # block-diag fc[7]/classifier[7]
                 + B * dim * pred_dim + B * pred_dim * dim)  # predictor
    bytes_accessed = (patches.size * 2 + packed["w_slab"].size * 4
                      + packed["v_slab"].size * 4 + B * 3 * LANE * 4)

    vmem = pl.BlockSpec(memory_space=pltpu.MemorySpace.VMEM)
    out = pl.pallas_call(
        functools.partial(_fused_forward_kernel, batch=B, spatial=H * W, ck=ck,
                          prev_dim=prev_dim, dim=dim, pred_dim=pred_dim,
                          n_classes=n_classes, offs=offs),
        out_shape=jax.ShapeDtypeStruct((B, 3 * LANE), jnp.float32),
        in_specs=[vmem, vmem, vmem],
        out_specs=vmem,
        compiler_params=pltpu.CompilerParams(vmem_limit_bytes=32 * 1024 * 1024),
        cost_estimate=pl.CostEstimate(flops=int(flops), transcendentals=256,
                                      bytes_accessed=int(bytes_accessed)),
    )(patches, packed["w_slab"], packed["v_slab"])

    p1 = out[:, :dim]
    z1 = out[:, LANE:LANE + dim]
    cls = out[:, 2 * LANE:2 * LANE + n_classes]
    return p1, lax.stop_gradient(z1), cls


if __name__ == "__main__":
    key = jax.random.PRNGKey(0)
    k_param, k_x = jax.random.split(key)
    B, C, H, W = 2, 4, 16, 16
    cfg = dict(in_ch=C, prev_dim=32, dim=64, pred_dim=16, n_classes=10)

    params = init_params(k_param, **cfg)
    packed = pack_params(params, **cfg)
    x = jax.random.normal(k_x, (B, C, H, W), jnp.float32)

    p1, z1, cls = simsiam_v2ce_forward(packed, x)
    jax.block_until_ready((p1, z1, cls))

    assert p1.shape == (B, 64) and z1.shape == (B, 64) and cls.shape == (B, 10)
    assert bool(jnp.all(jnp.isfinite(p1)))
    assert bool(jnp.all(jnp.isfinite(z1)))
    assert bool(jnp.all(jnp.isfinite(cls)))
    # affine-free BatchNorm1d sanity: z1 is batch-centered per column
    assert bool(jnp.all(jnp.abs(jnp.mean(z1, axis=0)) < 5e-3))
    print("KERNEL_OK")
</pallas_src>

<mosaic_0001>
module attributes {stable_mosaic.version = 11 : i64} {
  func.func @_fused_forward_kernel(%arg0: memref<512x48xbf16, #tpu.memory_space<vmem>>, %arg1: memref<272x128xf32, #tpu.memory_space<vmem>>, %arg2: memref<16x128xf32, #tpu.memory_space<vmem>>, %arg3: memref<2x384xf32, #tpu.memory_space<vmem>>) attributes {dimension_semantics = [], scalar_prefetch = 0 : i64, scratch_operands = 0 : i64, tpu.core_type = #tpu.core_type<tc>} {
    %c0 = arith.constant 0 : index
    %c0_0 = arith.constant 0 : index
    %0 = vector.load %arg1[%c0, %c0_0] : memref<272x128xf32, #tpu.memory_space<vmem>>, vector<48x32xf32>
    %1 = arith.truncf %0 : vector<48x32xf32> to vector<48x32xbf16>
    %c0_1 = arith.constant 0 : index
    %c0_2 = arith.constant 0 : index
    %2 = vector.load %arg0[%c0_1, %c0_2] : memref<512x48xbf16, #tpu.memory_space<vmem>>, vector<512x48xbf16>
    %cst = arith.constant dense<0.000000e+00> : vector<512x32xf32>
    %3 = tpu.matmul %2, %1, %cst {dimension_numbers = #tpu.dot_dimension_numbers<[1], [0], [0], [1], [0, 0, 1, 1], [], []>} : vector<512x48xbf16>, vector<48x32xbf16>, vector<512x32xf32> -> vector<512x32xf32>
    %4 = vector.extract_strided_slice %3 {offsets = [0, 0], sizes = [1, 32], strides = [1, 1]} : vector<512x32xf32> to vector<1x32xf32>
    %5 = vector.broadcast %4 : vector<1x32xf32> to vector<512x32xf32>
    %6 = arith.subf %3, %5 : vector<512x32xf32>
    %7 = arith.mulf %6, %6 : vector<512x32xf32>
    %8 = tpu.concatenate %6, %7 in 1 : vector<512x32xf32>, vector<512x32xf32> -> vector<512x64xf32>
    %cst_3 = arith.constant dense<0.000000e+00> : vector<64xf32>
    %9 = vector.multi_reduction <add>, %8, %cst_3 [0] : vector<512x64xf32> to vector<64xf32>
    %10 = vector.shape_cast %9 : vector<64xf32> to vector<1x64xf32>
    %cst_4 = arith.constant 5.120000e+02 : f32
    %11 = vector.broadcast %cst_4 : f32 to vector<1x64xf32>
    %12 = arith.divf %10, %11 : vector<1x64xf32>
    %13 = vector.extract_strided_slice %12 {offsets = [0, 0], sizes = [1, 32], strides = [1, 1]} : vector<1x64xf32> to vector<1x32xf32>
    %14 = vector.extract_strided_slice %12 {offsets = [0, 32], sizes = [1, 32], strides = [1, 1]} : vector<1x64xf32> to vector<1x32xf32>
    %15 = arith.addf %13, %4 : vector<1x32xf32>
    %16 = arith.mulf %13, %13 : vector<1x32xf32>
    %17 = arith.subf %14, %16 : vector<1x32xf32>
    %cst_5 = arith.constant 0.000000e+00 : f32
    %18 = vector.broadcast %cst_5 : f32 to vector<1x32xf32>
    %19 = arith.maximumf %17, %18 : vector<1x32xf32>
    %20 = vector.broadcast %15 : vector<1x32xf32> to vector<512x32xf32>
    %21 = arith.subf %3, %20 : vector<512x32xf32>
    %cst_6 = arith.constant 9.99999974E-6 : f32
    %22 = vector.broadcast %cst_6 : f32 to vector<1x32xf32>
    %23 = arith.addf %19, %22 : vector<1x32xf32>
    %24 = math.rsqrt %23 : vector<1x32xf32>
    %25 = vector.broadcast %24 : vector<1x32xf32> to vector<512x32xf32>
    %26 = arith.mulf %21, %25 : vector<512x32xf32>
    %c0_7 = arith.constant 0 : index
    %c0_8 = arith.constant 0 : index
    %27 = vector.load %arg2[%c0_7, %c0_8] : memref<16x128xf32, #tpu.memory_space<vmem>>, vector<1x32xf32>
    %28 = vector.broadcast %27 : vector<1x32xf32> to vector<512x32xf32>
    %29 = arith.mulf %26, %28 : vector<512x32xf32>
    %c1 = arith.constant 1 : index
    %c0_9 = arith.constant 0 : index
    %30 = vector.load %arg2[%c1, %c0_9] : memref<16x128xf32, #tpu.memory_space<vmem>>, vector<1x32xf32>
    %31 = vector.broadcast %30 : vector<1x32xf32> to vector<512x32xf32>
    %32 = arith.addf %29, %31 : vector<512x32xf32>
    %cst_10 = arith.constant 0.000000e+00 : f32
    %33 = vector.broadcast %cst_10 : f32 to vector<512x32xf32>
    %34 = arith.maximumf %32, %33 : vector<512x32xf32>
    %35 = tpu.iota {dimensions = array<i32: 0>} : vector<2x512xi32>
    %36 = tpu.iota {dimensions = array<i32: 1>} : vector<2x512xi32>
    %c256_i32 = arith.constant 256 : i32
    %37 = vector.broadcast %c256_i32 : i32 to vector<2x512xi32>
    %38 = arith.muli %35, %37 : vector<2x512xi32>
    %39 = arith.cmpi sge, %36, %38 : vector<2x512xi32>
    %c256_i32_11 = arith.constant 256 : i32
    %40 = vector.broadcast %c256_i32_11 : i32 to vector<2x512xi32>
    %41 = arith.addi %38, %40 : vector<2x512xi32>
    %42 = arith.cmpi slt, %36, %41 : vector<2x512xi32>
    %43 = arith.andi %39, %42 : vector<2x512xi1>
    %cst_12 = arith.constant 3.906250e-03 : f32
    %cst_13 = arith.constant 0.000000e+00 : f32
    %44 = vector.broadcast %cst_12 : f32 to vector<2x512xf32>
    %45 = vector.broadcast %cst_13 : f32 to vector<2x512xf32>
    %46 = arith.select %43, %44, %45 : vector<2x512xi1>, vector<2x512xf32>
    %cst_14 = arith.constant dense<0.000000e+00> : vector<2x32xf32>
    %47 = tpu.matmul %46, %34, %cst_14 {dimension_numbers = #tpu.dot_dimension_numbers<[1], [0], [0], [1], [0, 0, 1, 1], [], []>} : vector<2x512xf32>, vector<512x32xf32>, vector<2x32xf32> -> vector<2x32xf32>
    %c48 = arith.constant 48 : index
    %c0_15 = arith.constant 0 : index
    %48 = vector.load %arg1[%c48, %c0_15] : memref<272x128xf32, #tpu.memory_space<vmem>>, vector<32x64xf32>
    %cst_16 = arith.constant dense<0.000000e+00> : vector<2x64xf32>
    %49 = tpu.matmul %47, %48, %cst_16 {dimension_numbers = #tpu.dot_dimension_numbers<[1], [0], [0], [1], [0, 0, 1, 1], [], []>} : vector<2x32xf32>, vector<32x64xf32>, vector<2x64xf32> -> vector<2x64xf32>
    %c2 = arith.constant 2 : index
    %c0_17 = arith.constant 0 : index
    %50 = vector.load %arg2[%c2, %c0_17] : memref<16x128xf32, #tpu.memory_space<vmem>>, vector<1x64xf32>
    %c3 = arith.constant 3 : index
    %c0_18 = arith.constant 0 : index
    %51 = vector.load %arg2[%c3, %c0_18] : memref<16x128xf32, #tpu.memory_space<vmem>>, vector<1x64xf32>
    %52 = vector.extract_strided_slice %49 {offsets = [0, 0], sizes = [1, 64], strides = [1, 1]} : vector<2x64xf32> to vector<1x64xf32>
    %53 = vector.broadcast %52 : vector<1x64xf32> to vector<2x64xf32>
    %54 = arith.subf %49, %53 : vector<2x64xf32>
    %55 = arith.mulf %54, %54 : vector<2x64xf32>
    %56 = tpu.concatenate %54, %55 in 1 : vector<2x64xf32>, vector<2x64xf32> -> vector<2x128xf32>
    %cst_19 = arith.constant dense<0.000000e+00> : vector<128xf32>
    %57 = vector.multi_reduction <add>, %56, %cst_19 [0] : vector<2x128xf32> to vector<128xf32>
    %58 = vector.shape_cast %57 : vector<128xf32> to vector<1x128xf32>
    %cst_20 = arith.constant 2.000000e+00 : f32
    %59 = vector.broadcast %cst_20 : f32 to vector<1x128xf32>
    %60 = arith.divf %58, %59 : vector<1x128xf32>
    %61 = vector.extract_strided_slice %60 {offsets = [0, 0], sizes = [1, 64], strides = [1, 1]} : vector<1x128xf32> to vector<1x64xf32>
    %62 = vector.extract_strided_slice %60 {offsets = [0, 64], sizes = [1, 64], strides = [1, 1]} : vector<1x128xf32> to vector<1x64xf32>
    %63 = arith.addf %61, %52 : vector<1x64xf32>
    %64 = arith.mulf %61, %61 : vector<1x64xf32>
    %65 = arith.subf %62, %64 : vector<1x64xf32>
    %cst_21 = arith.constant 0.000000e+00 : f32
    %66 = vector.broadcast %cst_21 : f32 to vector<1x64xf32>
    %67 = arith.maximumf %65, %66 : vector<1x64xf32>
    %68 = vector.broadcast %63 : vector<1x64xf32> to vector<2x64xf32>
    %69 = arith.subf %49, %68 : vector<2x64xf32>
    %cst_22 = arith.constant 9.99999974E-6 : f32
    %70 = vector.broadcast %cst_22 : f32 to vector<1x64xf32>
    %71 = arith.addf %67, %70 : vector<1x64xf32>
    %72 = math.rsqrt %71 : vector<1x64xf32>
    %73 = vector.broadcast %72 : vector<1x64xf32> to vector<2x64xf32>
    %74 = arith.mulf %69, %73 : vector<2x64xf32>
    %75 = vector.broadcast %50 : vector<1x64xf32> to vector<2x64xf32>
    %76 = arith.mulf %74, %75 : vector<2x64xf32>
    %77 = vector.broadcast %51 : vector<1x64xf32> to vector<2x64xf32>
    %78 = arith.addf %76, %77 : vector<2x64xf32>
    %cst_23 = arith.constant 0.000000e+00 : f32
    %79 = vector.broadcast %cst_23 : f32 to vector<2x64xf32>
    %80 = arith.maximumf %78, %79 : vector<2x64xf32>
    %c80 = arith.constant 80 : index
    %c0_24 = arith.constant 0 : index
    %81 = vector.load %arg1[%c80, %c0_24] : memref<272x128xf32, #tpu.memory_space<vmem>>, vector<64x48xf32>
    %cst_25 = arith.constant dense<0.000000e+00> : vector<2x48xf32>
    %82 = tpu.matmul %80, %81, %cst_25 {dimension_numbers = #tpu.dot_dimension_numbers<[1], [0], [0], [1], [0, 0, 1, 1], [], []>} : vector<2x64xf32>, vector<64x48xf32>, vector<2x48xf32> -> vector<2x48xf32>
    %c4 = arith.constant 4 : index
    %c0_26 = arith.constant 0 : index
    %83 = vector.load %arg2[%c4, %c0_26] : memref<16x128xf32, #tpu.memory_space<vmem>>, vector<1x48xf32>
    %c5 = arith.constant 5 : index
    %c0_27 = arith.constant 0 : index
    %84 = vector.load %arg2[%c5, %c0_27] : memref<16x128xf32, #tpu.memory_space<vmem>>, vector<1x48xf32>
    %85 = vector.extract_strided_slice %82 {offsets = [0, 0], sizes = [1, 48], strides = [1, 1]} : vector<2x48xf32> to vector<1x48xf32>
    %86 = vector.broadcast %85 : vector<1x48xf32> to vector<2x48xf32>
    %87 = arith.subf %82, %86 : vector<2x48xf32>
    %88 = arith.mulf %87, %87 : vector<2x48xf32>
    %89 = tpu.concatenate %87, %88 in 1 : vector<2x48xf32>, vector<2x48xf32> -> vector<2x96xf32>
    %cst_28 = arith.constant dense<0.000000e+00> : vector<96xf32>
    %90 = vector.multi_reduction <add>, %89, %cst_28 [0] : vector<2x96xf32> to vector<96xf32>
    %91 = vector.shape_cast %90 : vector<96xf32> to vector<1x96xf32>
    %cst_29 = arith.constant 2.000000e+00 : f32
    %92 = vector.broadcast %cst_29 : f32 to vector<1x96xf32>
    %93 = arith.divf %91, %92 : vector<1x96xf32>
    %94 = vector.extract_strided_slice %93 {offsets = [0, 0], sizes = [1, 48], strides = [1, 1]} : vector<1x96xf32> to vector<1x48xf32>
    %95 = vector.extract_strided_slice %93 {offsets = [0, 48], sizes = [1, 48], strides = [1, 1]} : vector<1x96xf32> to vector<1x48xf32>
    %96 = arith.addf %94, %85 : vector<1x48xf32>
    %97 = arith.mulf %94, %94 : vector<1x48xf32>
    %98 = arith.subf %95, %97 : vector<1x48xf32>
    %cst_30 = arith.constant 0.000000e+00 : f32
    %99 = vector.broadcast %cst_30 : f32 to vector<1x48xf32>
    %100 = arith.maximumf %98, %99 : vector<1x48xf32>
    %101 = vector.broadcast %96 : vector<1x48xf32> to vector<2x48xf32>
    %102 = arith.subf %82, %101 : vector<2x48xf32>
    %cst_31 = arith.constant 9.99999974E-6 : f32
    %103 = vector.broadcast %cst_31 : f32 to vector<1x48xf32>
    %104 = arith.addf %100, %103 : vector<1x48xf32>
    %105 = math.rsqrt %104 : vector<1x48xf32>
    %106 = vector.broadcast %105 : vector<1x48xf32> to vector<2x48xf32>
    %107 = arith.mulf %102, %106 : vector<2x48xf32>
    %108 = vector.broadcast %83 : vector<1x48xf32> to vector<2x48xf32>
    %109 = arith.mulf %107, %108 : vector<2x48xf32>
    %110 = vector.broadcast %84 : vector<1x48xf32> to vector<2x48xf32>
    %111 = arith.addf %109, %110 : vector<2x48xf32>
    %cst_32 = arith.constant 0.000000e+00 : f32
    %112 = vector.broadcast %cst_32 : f32 to vector<2x48xf32>
    %113 = arith.maximumf %111, %112 : vector<2x48xf32>
    %c144 = arith.constant 144 : index
    %c0_33 = arith.constant 0 : index
    %114 = vector.load %arg1[%c144, %c0_33] : memref<272x128xf32, #tpu.memory_space<vmem>>, vector<48x74xf32>
    %cst_34 = arith.constant dense<0.000000e+00> : vector<2x74xf32>
    %115 = tpu.matmul %113, %114, %cst_34 {dimension_numbers = #tpu.dot_dimension_numbers<[1], [0], [0], [1], [0, 0, 1, 1], [], []>} : vector<2x48xf32>, vector<48x74xf32>, vector<2x74xf32> -> vector<2x74xf32>
    %c9 = arith.constant 9 : index
    %c0_35 = arith.constant 0 : index
    %116 = vector.load %arg2[%c9, %c0_35] : memref<16x128xf32, #tpu.memory_space<vmem>>, vector<1x74xf32>
    %117 = vector.broadcast %116 : vector<1x74xf32> to vector<2x74xf32>
    %118 = arith.addf %115, %117 : vector<2x74xf32>
    %119 = vector.extract_strided_slice %118 {offsets = [0, 0], sizes = [2, 64], strides = [1, 1]} : vector<2x74xf32> to vector<2x64xf32>
    %120 = vector.extract_strided_slice %118 {offsets = [0, 64], sizes = [2, 10], strides = [1, 1]} : vector<2x74xf32> to vector<2x10xf32>
    %121 = vector.extract_strided_slice %119 {offsets = [0, 0], sizes = [1, 64], strides = [1, 1]} : vector<2x64xf32> to vector<1x64xf32>
    %122 = vector.broadcast %121 : vector<1x64xf32> to vector<2x64xf32>
    %123 = arith.subf %119, %122 : vector<2x64xf32>
    %124 = arith.mulf %123, %123 : vector<2x64xf32>
    %125 = tpu.concatenate %123, %124 in 1 : vector<2x64xf32>, vector<2x64xf32> -> vector<2x128xf32>
    %cst_36 = arith.constant dense<0.000000e+00> : vector<128xf32>
    %126 = vector.multi_reduction <add>, %125, %cst_36 [0] : vector<2x128xf32> to vector<128xf32>
    %127 = vector.shape_cast %126 : vector<128xf32> to vector<1x128xf32>
    %cst_37 = arith.constant 2.000000e+00 : f32
    %128 = vector.broadcast %cst_37 : f32 to vector<1x128xf32>
    %129 = arith.divf %127, %128 : vector<1x128xf32>
    %130 = vector.extract_strided_slice %129 {offsets = [0, 0], sizes = [1, 64], strides = [1, 1]} : vector<1x128xf32> to vector<1x64xf32>
    %131 = vector.extract_strided_slice %129 {offsets = [0, 64], sizes = [1, 64], strides = [1, 1]} : vector<1x128xf32> to vector<1x64xf32>
    %132 = arith.addf %130, %121 : vector<1x64xf32>
    %133 = arith.mulf %130, %130 : vector<1x64xf32>
    %134 = arith.subf %131, %133 : vector<1x64xf32>
    %cst_38 = arith.constant 0.000000e+00 : f32
    %135 = vector.broadcast %cst_38 : f32 to vector<1x64xf32>
    %136 = arith.maximumf %134, %135 : vector<1x64xf32>
    %137 = vector.broadcast %132 : vector<1x64xf32> to vector<2x64xf32>
    %138 = arith.subf %119, %137 : vector<2x64xf32>
    %cst_39 = arith.constant 9.99999974E-6 : f32
    %139 = vector.broadcast %cst_39 : f32 to vector<1x64xf32>
    %140 = arith.addf %136, %139 : vector<1x64xf32>
    %141 = math.rsqrt %140 : vector<1x64xf32>
    %142 = vector.broadcast %141 : vector<1x64xf32> to vector<2x64xf32>
    %143 = arith.mulf %138, %142 : vector<2x64xf32>
    %c192 = arith.constant 192 : index
    %c0_40 = arith.constant 0 : index
    %144 = vector.load %arg1[%c192, %c0_40] : memref<272x128xf32, #tpu.memory_space<vmem>>, vector<64x16xf32>
    %cst_41 = arith.constant dense<0.000000e+00> : vector<2x16xf32>
    %145 = tpu.matmul %143, %144, %cst_41 {dimension_numbers = #tpu.dot_dimension_numbers<[1], [0], [0], [1], [0, 0, 1, 1], [], []>} : vector<2x64xf32>, vector<64x16xf32>, vector<2x16xf32> -> vector<2x16xf32>
    %c6 = arith.constant 6 : index
    %c0_42 = arith.constant 0 : index
    %146 = vector.load %arg2[%c6, %c0_42] : memref<16x128xf32, #tpu.memory_space<vmem>>, vector<1x16xf32>
    %c7 = arith.constant 7 : index
    %c0_43 = arith.constant 0 : index
    %147 = vector.load %arg2[%c7, %c0_43] : memref<16x128xf32, #tpu.memory_space<vmem>>, vector<1x16xf32>
    %148 = vector.extract_strided_slice %145 {offsets = [0, 0], sizes = [1, 16], strides = [1, 1]} : vector<2x16xf32> to vector<1x16xf32>
    %149 = vector.broadcast %148 : vector<1x16xf32> to vector<2x16xf32>
    %150 = arith.subf %145, %149 : vector<2x16xf32>
    %151 = arith.mulf %150, %150 : vector<2x16xf32>
    %152 = tpu.concatenate %150, %151 in 1 : vector<2x16xf32>, vector<2x16xf32> -> vector<2x32xf32>
    %cst_44 = arith.constant dense<0.000000e+00> : vector<32xf32>
    %153 = vector.multi_reduction <add>, %152, %cst_44 [0] : vector<2x32xf32> to vector<32xf32>
    %154 = vector.shape_cast %153 : vector<32xf32> to vector<1x32xf32>
    %cst_45 = arith.constant 2.000000e+00 : f32
    %155 = vector.broadcast %cst_45 : f32 to vector<1x32xf32>
    %156 = arith.divf %154, %155 : vector<1x32xf32>
    %157 = vector.extract_strided_slice %156 {offsets = [0, 0], sizes = [1, 16], strides = [1, 1]} : vector<1x32xf32> to vector<1x16xf32>
    %158 = vector.extract_strided_slice %156 {offsets = [0, 16], sizes = [1, 16], strides = [1, 1]} : vector<1x32xf32> to vector<1x16xf32>
    %159 = arith.addf %157, %148 : vector<1x16xf32>
    %160 = arith.mulf %157, %157 : vector<1x16xf32>
    %161 = arith.subf %158, %160 : vector<1x16xf32>
    %cst_46 = arith.constant 0.000000e+00 : f32
    %162 = vector.broadcast %cst_46 : f32 to vector<1x16xf32>
    %163 = arith.maximumf %161, %162 : vector<1x16xf32>
    %164 = vector.broadcast %159 : vector<1x16xf32> to vector<2x16xf32>
    %165 = arith.subf %145, %164 : vector<2x16xf32>
    %cst_47 = arith.constant 9.99999974E-6 : f32
    %166 = vector.broadcast %cst_47 : f32 to vector<1x16xf32>
    %167 = arith.addf %163, %166 : vector<1x16xf32>
    %168 = math.rsqrt %167 : vector<1x16xf32>
    %169 = vector.broadcast %168 : vector<1x16xf32> to vector<2x16xf32>
    %170 = arith.mulf %165, %169 : vector<2x16xf32>
    %171 = vector.broadcast %146 : vector<1x16xf32> to vector<2x16xf32>
    %172 = arith.mulf %170, %171 : vector<2x16xf32>
    %173 = vector.broadcast %147 : vector<1x16xf32> to vector<2x16xf32>
    %174 = arith.addf %172, %173 : vector<2x16xf32>
    %cst_48 = arith.constant 0.000000e+00 : f32
    %175 = vector.broadcast %cst_48 : f32 to vector<2x16xf32>
    %176 = arith.maximumf %174, %175 : vector<2x16xf32>
    %c256 = arith.constant 256 : index
    %c0_49 = arith.constant 0 : index
    %177 = vector.load %arg1[%c256, %c0_49] : memref<272x128xf32, #tpu.memory_space<vmem>>, vector<16x64xf32>
    %cst_50 = arith.constant dense<0.000000e+00> : vector<2x64xf32>
    %178 = tpu.matmul %176, %177, %cst_50 {dimension_numbers = #tpu.dot_dimension_numbers<[1], [0], [0], [1], [0, 0, 1, 1], [], []>} : vector<2x16xf32>, vector<16x64xf32>, vector<2x64xf32> -> vector<2x64xf32>
    %c8 = arith.constant 8 : index
    %c0_51 = arith.constant 0 : index
    %179 = vector.load %arg2[%c8, %c0_51] : memref<16x128xf32, #tpu.memory_space<vmem>>, vector<1x64xf32>
    %180 = vector.broadcast %179 : vector<1x64xf32> to vector<2x64xf32>
    %181 = arith.addf %178, %180 : vector<2x64xf32>
    %cst_52 = arith.constant 0.000000e+00 : f32
    %182 = vector.broadcast %cst_52 : f32 to vector<2x384xf32>
    %c0_53 = arith.constant 0 : index
    %c0_54 = arith.constant 0 : index
    %183 = vector.load %arg3[%c0_53, %c0_54] : memref<2x384xf32, #tpu.memory_space<vmem>>, vector<2x384xf32>
    tpu.vector_store %arg3[%c0_53, %c0_54], %182 {strides = array<i32>} : memref<2x384xf32, #tpu.memory_space<vmem>>, vector<2x384xf32>,
    %c0_55 = arith.constant 0 : index
    %c0_56 = arith.constant 0 : index
    %184 = vector.load %arg3[%c0_55, %c0_56] : memref<2x384xf32, #tpu.memory_space<vmem>>, vector<2x64xf32>
    tpu.vector_store %arg3[%c0_55, %c0_56], %181 {strides = array<i32>} : memref<2x384xf32, #tpu.memory_space<vmem>>, vector<2x64xf32>,
    %c0_57 = arith.constant 0 : index
    %c128 = arith.constant 128 : index
    %185 = vector.load %arg3[%c0_57, %c128] : memref<2x384xf32, #tpu.memory_space<vmem>>, vector<2x64xf32>
    tpu.vector_store %arg3[%c0_57, %c128], %143 {strides = array<i32>} : memref<2x384xf32, #tpu.memory_space<vmem>>, vector<2x64xf32>,
    %c0_58 = arith.constant 0 : index
    %c256_59 = arith.constant 256 : index
    %186 = vector.load %arg3[%c0_58, %c256_59] : memref<2x384xf32, #tpu.memory_space<vmem>>, vector<2x10xf32>
    tpu.vector_store %arg3[%c0_58, %c256_59], %120 {strides = array<i32>} : memref<2x384xf32, #tpu.memory_space<vmem>>, vector<2x10xf32>,
    return
  }
}

</mosaic_0001>

<llo_original>
// kernel: simsiam_v2ce_forward.1
$region0: #{simsiam_v2ce_forward.1}
  #allocation0 [shape = 'u32[]', space=smem, size = 0x4, offset = 0x4, fixed_abs, tag = 'smem constant byte address 0x4 - core index']
  #allocation1 [shape = 'u32[144,128]{1,0:T(1,128)}', space=vmem, size = 0x12000, scoped, tag = 'internal scratch']
  %s0 = inlined_call_operand.vmem [shape: bf16[512,48], index: 0, kind: input, shape index: {}]
  %s1 = inlined_call_operand.vmem [shape: f32[272,128], index: 1, kind: input, shape index: {}]
  %s2 = inlined_call_operand.vmem [shape: f32[16,128], index: 2, kind: input, shape index: {}]
  %s3 = inlined_call_operand.vmem [shape: f32[2,384], index: 3, kind: output, shape index: {}]
  %s4 = sld [smem:[#allocation0]]
  $region22: #{simsiam_v2ce_forward.1} parent=0
    _
  %s6 = ssub.s32 1, %s4
  %s7 = scalar_select 0, %s6, %s4
  // Predicated region
  $region2: #{simsiam_v2ce_forward.1} parent=0 // pred_check
    _
  $region3: #{simsiam_v2ce_forward.1} parent=0 // pred_check_branch
    %9 = sbr.rel (0) target = $region5
  $region4: #{simsiam_v2ce_forward.1} parent=0 // pred_region
    _
  $region5: #{simsiam_v2ce_forward.1} parent=0 // pred_fallthru
    _
  // Predicated region
  $region6: #{simsiam_v2ce_forward.1} parent=0 // pred_check
    _
  $region7: #{simsiam_v2ce_forward.1} parent=0 // pred_check_branch
    %11 = sbr.rel (0) target = $region9
  $region8: #{simsiam_v2ce_forward.1} parent=0 // pred_region
    _
  $region9: #{simsiam_v2ce_forward.1} parent=0 // pred_fallthru
    _
  // Predicated region
  $region10: #{simsiam_v2ce_forward.1} parent=0 // pred_check
    _
  $region11: #{simsiam_v2ce_forward.1} parent=0 // pred_check_branch
    %13 = sbr.rel (0) target = $region13
  $region12: #{simsiam_v2ce_forward.1} parent=0 // pred_region
    _
  $region13: #{simsiam_v2ce_forward.1} parent=0 // pred_fallthru
    _
  %v15 = vld [vmem:[%s1] sm:$0xff]
  %v16 = vld [vmem:[%s1 + $0x8] sm:$0xff]
  %v17 = vld [vmem:[%s1 + $0x10] sm:$0xff]
  %v18 = vld [vmem:[%s1 + $0x18] sm:$0xff]
  %v19 = vld [vmem:[%s1 + $0x20] sm:$0xff]
  %v20 = vld [vmem:[%s1 + $0x28] sm:$0xff]
  %v21 = vpack.c.bf16 %v16, %v15
  %v22 = vpack.c.bf16 %v18, %v17
  %v23 = vpack.c.bf16 %v20, %v19
  %v24 = vld [vmem:[%s0] sm:$0xf]
  %v25 = vld [vmem:[%s0 + $0x4] sm:$0xf]
  %v26 = vld [vmem:[%s0 + $0x8] sm:$0xf]
  %v27 = vld [vmem:[%s0 + $0xc] sm:$0xf]
  %v28 = vld [vmem:[%s0 + $0x10] sm:$0xf]
  %v29 = vld [vmem:[%s0 + $0x14] sm:$0xf]
  %v30 = vld [vmem:[%s0 + $0x18] sm:$0xf]
  %v31 = vld [vmem:[%s0 + $0x1c] sm:$0xf]
  %v32 = vld [vmem:[%s0 + $0x20] sm:$0xf]
  %v33 = vld [vmem:[%s0 + $0x24] sm:$0xf]
  %v34 = vld [vmem:[%s0 + $0x28] sm:$0xf]
  %v35 = vld [vmem:[%s0 + $0x2c] sm:$0xf]
  %v36 = vld [vmem:[%s0 + $0x30] sm:$0xf]
  %v37 = vld [vmem:[%s0 + $0x34] sm:$0xf]
  %v38 = vld [vmem:[%s0 + $0x38] sm:$0xf]
  %v39 = vld [vmem:[%s0 + $0x3c] sm:$0xf]
  %v40 = vld [vmem:[%s0 + $0x40] sm:$0xf]
  %v41 = vld [vmem:[%s0 + $0x44] sm:$0xf]
  %v42 = vld [vmem:[%s0 + $0x48] sm:$0xf]
  %v43 = vld [vmem:[%s0 + $0x4c] sm:$0xf]
  %v44 = vld [vmem:[%s0 + $0x50] sm:$0xf]
  %v45 = vld [vmem:[%s0 + $0x54] sm:$0xf]
  %v46 = vld [vmem:[%s0 + $0x58] sm:$0xf]
  %v47 = vld [vmem:[%s0 + $0x5c] sm:$0xf]
  %v48 = vld [vmem:[%s0 + $0x60] sm:$0xf]
  %v49 = vld [vmem:[%s0 + $0x64] sm:$0xf]
  %v50 = vld [vmem:[%s0 + $0x68] sm:$0xf]
  %v51 = vld [vmem:[%s0 + $0x6c] sm:$0xf]
  %v52 = vld [vmem:[%s0 + $0x70] sm:$0xf]
  %v53 = vld [vmem:[%s0 + $0x74] sm:$0xf]
  %v54 = vld [vmem:[%s0 + $0x78] sm:$0xf]
  %v55 = vld [vmem:[%s0 + $0x7c] sm:$0xf]
  %v56 = vld [vmem:[%s0 + $0x80] sm:$0xf]
  %v57 = vld [vmem:[%s0 + $0x84] sm:$0xf]
  %v58 = vld [vmem:[%s0 + $0x88] sm:$0xf]
  %v59 = vld [vmem:[%s0 + $0x8c] sm:$0xf]
  %v60 = vld [vmem:[%s0 + $0x90] sm:$0xf]
  %v61 = vld [vmem:[%s0 + $0x94] sm:$0xf]
  %v62 = vld [vmem:[%s0 + $0x98] sm:$0xf]
  %v63 = vld [vmem:[%s0 + $0x9c] sm:$0xf]
  %v64 = vld [vmem:[%s0 + $0xa0] sm:$0xf]
  %v65 = vld [vmem:[%s0 + $0xa4] sm:$0xf]
  %v66 = vld [vmem:[%s0 + $0xa8] sm:$0xf]
  %v67 = vld [vmem:[%s0 + $0xac] sm:$0xf]
  %v68 = vld [vmem:[%s0 + $0xb0] sm:$0xf]
  %v69 = vld [vmem:[%s0 + $0xb4] sm:$0xf]
  %v70 = vld [vmem:[%s0 + $0xb8] sm:$0xf]
  %v71 = vld [vmem:[%s0 + $0xbc] sm:$0xf]
  %v72 = vld [vmem:[%s0 + $0xc0] sm:$0xf]
  %v73 = vld [vmem:[%s0 + $0xc4] sm:$0xf]
  %v74 = vld [vmem:[%s0 + $0xc8] sm:$0xf]
  %v75 = vld [vmem:[%s0 + $0xcc] sm:$0xf]
  %v76 = vld [vmem:[%s0 + $0xd0] sm:$0xf]
  %v77 = vld [vmem:[%s0 + $0xd4] sm:$0xf]
  %v78 = vld [vmem:[%s0 + $0xd8] sm:$0xf]
  %v79 = vld [vmem:[%s0 + $0xdc] sm:$0xf]
  %v80 = vld [vmem:[%s0 + $0xe0] sm:$0xf]
  %v81 = vld [vmem:[%s0 + $0xe4] sm:$0xf]
  %v82 = vld [vmem:[%s0 + $0xe8] sm:$0xf]
  %v83 = vld [vmem:[%s0 + $0xec] sm:$0xf]
  %v84 = vld [vmem:[%s0 + $0xf0] sm:$0xf]
  %v85 = vld [vmem:[%s0 + $0xf4] sm:$0xf]
  %v86 = vld [vmem:[%s0 + $0xf8] sm:$0xf]
  %v87 = vld [vmem:[%s0 + $0xfc] sm:$0xf]
  %v152 = vunpack.c.l.b16 %v24
  %v153 = vunpack.c.l.b16 %v25
  %v154 = vunpack.c.l.b16 %v26
  %v155 = vunpack.c.l.b16 %v27
  %v156 = vunpack.c.l.b16 %v28
  %v157 = vunpack.c.l.b16 %v29
  %v158 = vunpack.c.l.b16 %v30
  %v159 = vunpack.c.l.b16 %v31
  %v160 = vunpack.c.l.b16 %v32
  %v161 = vunpack.c.l.b16 %v33
  %v162 = vunpack.c.l.b16 %v34
  %v163 = vunpack.c.l.b16 %v35
  %v164 = vunpack.c.l.b16 %v36
  %v165 = vunpack.c.l.b16 %v37
  %v166 = vunpack.c.l.b16 %v38
  %v167 = vunpack.c.l.b16 %v39
  %v168 = vunpack.c.l.b16 %v40
  %v169 = vunpack.c.l.b16 %v41
  %v170 = vunpack.c.l.b16 %v42
  %v171 = vunpack.c.l.b16 %v43
  %v172 = vunpack.c.l.b16 %v44
  %v173 = vunpack.c.l.b16 %v45
  %v174 = vunpack.c.l.b16 %v46
  %v175 = vunpack.c.l.b16 %v47
  %v176 = vunpack.c.l.b16 %v48
  %v177 = vunpack.c.l.b16 %v49
  %v178 = vunpack.c.l.b16 %v50
  %v179 = vunpack.c.l.b16 %v51
  %v180 = vunpack.c.l.b16 %v52
  %v181 = vunpack.c.l.b16 %v53
  %v182 = vunpack.c.l.b16 %v54
  %v183 = vunpack.c.l.b16 %v55
  %v184 = vunpack.c.l.b16 %v56
  %v185 = vunpack.c.l.b16 %v57
  %v186 = vunpack.c.l.b16 %v58
  %v187 = vunpack.c.l.b16 %v59
  %v188 = vunpack.c.l.b16 %v60
  %v189 = vunpack.c.l.b16 %v61
  %v190 = vunpack.c.l.b16 %v62
  %v191 = vunpack.c.l.b16 %v63
  %v192 = vunpack.c.l.b16 %v64
  %v193 = vunpack.c.l.b16 %v65
  %v194 = vunpack.c.l.b16 %v66
  %v195 = vunpack.c.l.b16 %v67
  %v196 = vunpack.c.l.b16 %v68
  %v197 = vunpack.c.l.b16 %v69
  %v198 = vunpack.c.l.b16 %v70
  %v199 = vunpack.c.l.b16 %v71
  %v200 = vunpack.c.l.b16 %v72
  %v201 = vunpack.c.l.b16 %v73
  %v202 = vunpack.c.l.b16 %v74
  %v203 = vunpack.c.l.b16 %v75
  %v204 = vunpack.c.l.b16 %v76
  %v205 = vunpack.c.l.b16 %v77
  %v206 = vunpack.c.l.b16 %v78
  %v207 = vunpack.c.l.b16 %v79
  %v208 = vunpack.c.l.b16 %v80
  %v209 = vunpack.c.l.b16 %v81
  %v210 = vunpack.c.l.b16 %v82
  %v211 = vunpack.c.l.b16 %v83
  %v212 = vunpack.c.l.b16 %v84
  %v213 = vunpack.c.l.b16 %v85
  %v214 = vunpack.c.l.b16 %v86
  %v215 = vunpack.c.l.b16 %v87
  %v216 = vpack.c.b16 %v153, %v152
  %v217 = vpack.c.b16 %v155, %v154
  %v218 = vpack.c.b16 %v157, %v156
  %v219 = vpack.c.b16 %v159, %v158
  %v220 = vpack.c.b16 %v161, %v160
  %v221 = vpack.c.b16 %v163, %v162
  %v222 = vpack.c.b16 %v165, %v164
  %v223 = vpack.c.b16 %v167, %v166
  %v224 = vpack.c.b16 %v169, %v168
  %v225 = vpack.c.b16 %v171, %v170
  %v226 = vpack.c.b16 %v173, %v172
  %v227 = vpack.c.b16 %v175, %v174
  %v228 = vpack.c.b16 %v177, %v176
  %v229 = vpack.c.b16 %v179, %v178
  %v230 = vpack.c.b16 %v181, %v180
  %v231 = vpack.c.b16 %v183, %v182
  %v232 = vpack.c.b16 %v185, %v184
  %v233 = vpack.c.b16 %v187, %v186
  %v234 = vpack.c.b16 %v189, %v188
  %v235 = vpack.c.b16 %v191, %v190
  %v236 = vpack.c.b16 %v193, %v192
  %v237 = vpack.c.b16 %v195, %v194
  %v238 = vpack.c.b16 %v197, %v196
  %v239 = vpack.c.b16 %v199, %v198
  %v240 = vpack.c.b16 %v201, %v200
  %v241 = vpack.c.b16 %v203, %v202
  %v242 = vpack.c.b16 %v205, %v204
  %v243 = vpack.c.b16 %v207, %v206
  %v244 = vpack.c.b16 %v209, %v208
  %v245 = vpack.c.b16 %v211, %v210
  %v246 = vpack.c.b16 %v213, %v212
  %v247 = vpack.c.b16 %v215, %v214
  %vm248 = vcmask 392192
  %v250 = vsel %vm248, %v216, 0
  %v253 = vsel %vm248, %v217, 0
  %v256 = vsel %vm248, %v218, 0
  %v259 = vsel %vm248, %v219, 0
  %v262 = vsel %vm248, %v220, 0
  %v265 = vsel %vm248, %v221, 0
  %v268 = vsel %vm248, %v222, 0
  %v271 = vsel %vm248, %v223, 0
  %v274 = vsel %vm248, %v224, 0
  %v277 = vsel %vm248, %v225, 0
  %v280 = vsel %vm248, %v226, 0
  %v283 = vsel %vm248, %v227, 0
  %v286 = vsel %vm248, %v228, 0
  %v289 = vsel %vm248, %v229, 0
  %v292 = vsel %vm248, %v230, 0
  %v295 = vsel %vm248, %v231, 0
  %v298 = vsel %vm248, %v232, 0
  %v301 = vsel %vm248, %v233, 0
  %v304 = vsel %vm248, %v234, 0
  %v307 = vsel %vm248, %v235, 0
  %v310 = vsel %vm248, %v236, 0
  %v313 = vsel %vm248, %v237, 0
  %v316 = vsel %vm248, %v238, 0
  %v319 = vsel %vm248, %v239, 0
  %v322 = vsel %vm248, %v240, 0
  %v325 = vsel %vm248, %v241, 0
  %v328 = vsel %vm248, %v242, 0
  %v331 = vsel %vm248, %v243, 0
  %v334 = vsel %vm248, %v244, 0
  %v337 = vsel %vm248, %v245, 0
  %v340 = vsel %vm248, %v246, 0
  %v343 = vsel %vm248, %v247, 0
  %345 = vmatprep.subr.bf16.mxu0 0
  %346 = vmatpush1.bf16.msra.mxu0 %v21
  %347 = vmatprep.subr.bf16.mxu0 0
  %348 = vmatpush1.bf16.msra.mxu0 %v22
  %349 = vmatprep.subr.bf16.mxu0 0
  %350 = vmatpush1.bf16.msra.mxu0 %v23
  %351 = vmatprep.subr.bf16.mxu0 0
  %352 = vmatpush1.bf16.msra.mxu0 0
  %353 = vmatprep.subr.bf16.mxu0 0
  %354 = vmatpush1.bf16.msra.mxu0 0
  %355 = vmatprep.subr.bf16.mxu0 0
  %356 = vmatpush1.bf16.msra.mxu0 0
  %357 = vmatprep.subr.bf16.mxu0 0
  %358 = vmatpush1.bf16.msra.mxu0 0
  %359 = vmatprep.subr.bf16.mxu0 0
  %360 = vmatpush1.bf16.msra.mxu0 0
  %361 = vmatprep.subr.bf16.mxu0 0
  %362 = vmatpush1.bf16.msra.mxu0 0
  %363 = vmatprep.subr.bf16.mxu0 0
  %364 = vmatpush1.bf16.msra.mxu0 0
  %365 = vmatprep.subr.bf16.mxu0 0
  %366 = vmatpush1.bf16.msra.mxu0 0
  %367 = vmatprep.subr.bf16.mxu0 0
  %368 = vmatpush1.bf16.msra.mxu0 0
  %369 = vmatprep.subr.bf16.mxu0 0
  %370 = vmatpush1.bf16.msra.mxu0 0
  %371 = vmatprep.subr.bf16.mxu0 0
  %372 = vmatpush1.bf16.msra.mxu0 0
  %373 = vmatprep.subr.bf16.mxu0 0
  %374 = vmatpush1.bf16.msra.mxu0 0
  %375 = vmatprep.subr.bf16.mxu0 0
  %376 = vmatpush1.bf16.msra.mxu0 0
  %377 = vmatprep.mubr.bf16.mxu0 0
  %378 = vmatmul.mubr.bf16.gmra.mrb[0].mxu0 %v250
  %v379 = vpop.f32.mrb[0].mxu0
  %v380 = vadd.f32 0.0, %v379
  %v381 = vpop.f32.mrb[0].mxu0
  %v382 = vpop.f32.mrb[0].mxu0
  %v383 = vadd.f32 0.0, %v382
  %v384 = vpop.f32.mrb[0].mxu0
  %385 = vmatprep.mubr.bf16.mxu0 0
  %386 = vmatmul.mubr.bf16.gmra.mrb[0].mxu0 %v253
  %v387 = vpop.f32.mrb[0].mxu0
  %v388 = vadd.f32 0.0, %v387
  %v389 = vpop.f32.mrb[0].mxu0
  %v390 = vpop.f32.mrb[0].mxu0
  %v391 = vadd.f32 0.0, %v390
  %v392 = vpop.f32.mrb[0].mxu0
  %393 = vmatprep.mubr.bf16.mxu0 0
  %394 = vmatmul.mubr.bf16.gmra.mrb[0].mxu0 %v256
  %v395 = vpop.f32.mrb[0].mxu0
  %v396 = vadd.f32 0.0, %v395
  %v397 = vpop.f32.mrb[0].mxu0
  %v398 = vpop.f32.mrb[0].mxu0
  %v399 = vadd.f32 0.0, %v398
  %v400 = vpop.f32.mrb[0].mxu0
  %401 = vmatprep.mubr.bf16.mxu0 0
  %402 = vmatmul.mubr.bf16.gmra.mrb[0].mxu0 %v259
  %v403 = vpop.f32.mrb[0].mxu0
  %v404 = vadd.f32 0.0, %v403
  %v405 = vpop.f32.mrb[0].mxu0
  %v406 = vpop.f32.mrb[0].mxu0
  %v407 = vadd.f32 0.0, %v406
  %v408 = vpop.f32.mrb[0].mxu0
  %409 = vmatprep.mubr.bf16.mxu0 0
  %410 = vmatmul.mubr.bf16.gmra.mrb[0].mxu0 %v262
  %v411 = vpop.f32.mrb[0].mxu0
  %v412 = vadd.f32 0.0, %v411
  %v413 = vpop.f32.mrb[0].mxu0
  %v414 = vpop.f32.mrb[0].mxu0
  %v415 = vadd.f32 0.0, %v414
  %v416 = vpop.f32.mrb[0].mxu0
  %417 = vmatprep.mubr.bf16.mxu0 0
  %418 = vmatmul.mubr.bf16.gmra.mrb[0].mxu0 %v265
  %v419 = vpop.f32.mrb[0].mxu0
  %v420 = vadd.f32 0.0, %v419
  %v421 = vpop.f32.mrb[0].mxu0
  %v422 = vpop.f32.mrb[0].mxu0
  %v423 = vadd.f32 0.0, %v422
  %v424 = vpop.f32.mrb[0].mxu0
  %425 = vmatprep.mubr.bf16.mxu0 0
  %426 = vmatmul.mubr.bf16.gmra.mrb[0].mxu0 %v268
  %v427 = vpop.f32.mrb[0].mxu0
  %v428 = vadd.f32 0.0, %v427
  %v429 = vpop.f32.mrb[0].mxu0
  %v430 = vpop.f32.mrb[0].mxu0
  %v431 = vadd.f32 0.0, %v430
  %v432 = vpop.f32.mrb[0].mxu0
  %433 = vmatprep.mubr.bf16.mxu0 0
  %434 = vmatmul.mubr.bf16.gmra.mrb[0].mxu0 %v271
  %v435 = vpop.f32.mrb[0].mxu0
  %v436 = vadd.f32 0.0, %v435
  %v437 = vpop.f32.mrb[0].mxu0
  %v438 = vpop.f32.mrb[0].mxu0
  %v439 = vadd.f32 0.0, %v438
  %v440 = vpop.f32.mrb[0].mxu0
  %441 = vmatprep.mubr.bf16.mxu0 0
  %442 = vmatmul.mubr.bf16.gmra.mrb[0].mxu0 %v274
  %v443 = vpop.f32.mrb[0].mxu0
  %v444 = vadd.f32 0.0, %v443
  %v445 = vpop.f32.mrb[0].mxu0
  %v446 = vpop.f32.mrb[0].mxu0
  %v447 = vadd.f32 0.0, %v446
  %v448 = vpop.f32.mrb[0].mxu0
  %449 = vmatprep.mubr.bf16.mxu0 0
  %450 = vmatmul.mubr.bf16.gmra.mrb[0].mxu0 %v277
  %v451 = vpop.f32.mrb[0].mxu0
  %v452 = vadd.f32 0.0, %v451
  %v453 = vpop.f32.mrb[0].mxu0
  %v454 = vpop.f32.mrb[0].mxu0
  %v455 = vadd.f32 0.0, %v454
  %v456 = vpop.f32.mrb[0].mxu0
  %457 = vmatprep.mubr.bf16.mxu0 0
  %458 = vmatmul.mubr.bf16.gmra.mrb[0].mxu0 %v280
  %v459 = vpop.f32.mrb[0].mxu0
  %v460 = vadd.f32 0.0, %v459
  %v461 = vpop.f32.mrb[0].mxu0
  %v462 = vpop.f32.mrb[0].mxu0
  %v463 = vadd.f32 0.0, %v462
  %v464 = vpop.f32.mrb[0].mxu0
  %465 = vmatprep.mubr.bf16.mxu0 0
  %466 = vmatmul.mubr.bf16.gmra.mrb[0].mxu0 %v283
  %v467 = vpop.f32.mrb[0].mxu0
  %v468 = vadd.f32 0.0, %v467
  %v469 = vpop.f32.mrb[0].mxu0
  %v470 = vpop.f32.mrb[0].mxu0
  %v471 = vadd.f32 0.0, %v470
  %v472 = vpop.f32.mrb[0].mxu0
  %473 = vmatprep.mubr.bf16.mxu0 0
  %474 = vmatmul.mubr.bf16.gmra.mrb[0].mxu0 %v286
  %v475 = vpop.f32.mrb[0].mxu0
  %v476 = vadd.f32 0.0, %v475
  %v477 = vpop.f32.mrb[0].mxu0
  %v478 = vpop.f32.mrb[0].mxu0
  %v479 = vadd.f32 0.0, %v478
  %v480 = vpop.f32.mrb[0].mxu0
  %481 = vmatprep.mubr.bf16.mxu0 0
  %482 = vmatmul.mubr.bf16.gmra.mrb[0].mxu0 %v289
  %v483 = vpop.f32.mrb[0].mxu0
  %v484 = vadd.f32 0.0, %v483
  %v485 = vpop.f32.mrb[0].mxu0
  %v486 = vpop.f32.mrb[0].mxu0
  %v487 = vadd.f32 0.0, %v486
  %v488 = vpop.f32.mrb[0].mxu0
  %489 = vmatprep.mubr.bf16.mxu0 0
  %490 = vmatmul.mubr.bf16.gmra.mrb[0].mxu0 %v292
  %v491 = vpop.f32.mrb[0].mxu0
  %v492 = vadd.f32 0.0, %v491
  %v493 = vpop.f32.mrb[0].mxu0
  %v494 = vpop.f32.mrb[0].mxu0
  %v495 = vadd.f32 0.0, %v494
  %v496 = vpop.f32.mrb[0].mxu0
  %497 = vmatprep.mubr.bf16.mxu0 0
  %498 = vmatmul.mubr.bf16.gmra.mrb[0].mxu0 %v295
  %v499 = vpop.f32.mrb[0].mxu0
  %v500 = vadd.f32 0.0, %v499
  %v501 = vpop.f32.mrb[0].mxu0
  %v502 = vpop.f32.mrb[0].mxu0
  %v503 = vadd.f32 0.0, %v502
  %v504 = vpop.f32.mrb[0].mxu0
  %505 = vmatprep.mubr.bf16.mxu0 0
  %506 = vmatmul.mubr.bf16.gmra.mrb[0].mxu0 %v298
  %v507 = vpop.f32.mrb[0].mxu0
  %v508 = vadd.f32 0.0, %v507
  %v509 = vpop.f32.mrb[0].mxu0
  %v510 = vpop.f32.mrb[0].mxu0
  %v511 = vadd.f32 0.0, %v510
  %v512 = vpop.f32.mrb[0].mxu0
  %513 = vmatprep.mubr.bf16.mxu0 0
  %514 = vmatmul.mubr.bf16.gmra.mrb[0].mxu0 %v301
  %v515 = vpop.f32.mrb[0].mxu0
  %v516 = vadd.f32 0.0, %v515
  %v517 = vpop.f32.mrb[0].mxu0
  %v518 = vpop.f32.mrb[0].mxu0
  %v519 = vadd.f32 0.0, %v518
  %v520 = vpop.f32.mrb[0].mxu0
  %521 = vmatprep.mubr.bf16.mxu0 0
  %522 = vmatmul.mubr.bf16.gmra.mrb[0].mxu0 %v304
  %v523 = vpop.f32.mrb[0].mxu0
  %v524 = vadd.f32 0.0, %v523
  %v525 = vpop.f32.mrb[0].mxu0
  %v526 = vpop.f32.mrb[0].mxu0
  %v527 = vadd.f32 0.0, %v526
  %v528 = vpop.f32.mrb[0].mxu0
  %529 = vmatprep.mubr.bf16.mxu0 0
  %530 = vmatmul.mubr.bf16.gmra.mrb[0].mxu0 %v307
  %v531 = vpop.f32.mrb[0].mxu0
  %v532 = vadd.f32 0.0, %v531
  %v533 = vpop.f32.mrb[0].mxu0
  %v534 = vpop.f32.mrb[0].mxu0
  %v535 = vadd.f32 0.0, %v534
  %v536 = vpop.f32.mrb[0].mxu0
  %537 = vmatprep.mubr.bf16.mxu0 0
  %538 = vmatmul.mubr.bf16.gmra.mrb[0].mxu0 %v310
  %v539 = vpop.f32.mrb[0].mxu0
  %v540 = vadd.f32 0.0, %v539
  %v541 = vpop.f32.mrb[0].mxu0
  %v542 = vpop.f32.mrb[0].mxu0
  %v543 = vadd.f32 0.0, %v542
  %v544 = vpop.f32.mrb[0].mxu0
  %545 = vmatprep.mubr.bf16.mxu0 0
  %546 = vmatmul.mubr.bf16.gmra.mrb[0].mxu0 %v313
  %v547 = vpop.f32.mrb[0].mxu0
  %v548 = vadd.f32 0.0, %v547
  %v549 = vpop.f32.mrb[0].mxu0
  %v550 = vpop.f32.mrb[0].mxu0
  %v551 = vadd.f32 0.0, %v550
  %v552 = vpop.f32.mrb[0].mxu0
  %553 = vmatprep.mubr.bf16.mxu0 0
  %554 = vmatmul.mubr.bf16.gmra.mrb[0].mxu0 %v316
  %v555 = vpop.f32.mrb[0].mxu0
  %v556 = vadd.f32 0.0, %v555
  %v557 = vpop.f32.mrb[0].mxu0
  %v558 = vpop.f32.mrb[0].mxu0
  %v559 = vadd.f32 0.0, %v558
  %v560 = vpop.f32.mrb[0].mxu0
  %561 = vmatprep.mubr.bf16.mxu0 0
  %562 = vmatmul.mubr.bf16.gmra.mrb[0].mxu0 %v319
  %v563 = vpop.f32.mrb[0].mxu0
  %v564 = vadd.f32 0.0, %v563
  %v565 = vpop.f32.mrb[0].mxu0
  %v566 = vpop.f32.mrb[0].mxu0
  %v567 = vadd.f32 0.0, %v566
  %v568 = vpop.f32.mrb[0].mxu0
  %569 = vmatprep.mubr.bf16.mxu0 0
  %570 = vmatmul.mubr.bf16.gmra.mrb[0].mxu0 %v322
  %v571 = vpop.f32.mrb[0].mxu0
  %v572 = vadd.f32 0.0, %v571
  %v573 = vpop.f32.mrb[0].mxu0
  %v574 = vpop.f32.mrb[0].mxu0
  %v575 = vadd.f32 0.0, %v574
  %v576 = vpop.f32.mrb[0].mxu0
  %577 = vmatprep.mubr.bf16.mxu0 0
  %578 = vmatmul.mubr.bf16.gmra.mrb[0].mxu0 %v325
  %v579 = vpop.f32.mrb[0].mxu0
  %v580 = vadd.f32 0.0, %v579
  %v581 = vpop.f32.mrb[0].mxu0
  %v582 = vpop.f32.mrb[0].mxu0
  %v583 = vadd.f32 0.0, %v582
  %v584 = vpop.f32.mrb[0].mxu0
  %585 = vmatprep.mubr.bf16.mxu0 0
  %586 = vmatmul.mubr.bf16.gmra.mrb[0].mxu0 %v328
  %v587 = vpop.f32.mrb[0].mxu0
  %v588 = vadd.f32 0.0, %v587
  %v589 = vpop.f32.mrb[0].mxu0
  %v590 = vpop.f32.mrb[0].mxu0
  %v591 = vadd.f32 0.0, %v590
  %v592 = vpop.f32.mrb[0].mxu0
  %593 = vmatprep.mubr.bf16.mxu0 0
  %594 = vmatmul.mubr.bf16.gmra.mrb[0].mxu0 %v331
  %v595 = vpop.f32.mrb[0].mxu0
  %v596 = vadd.f32 0.0, %v595
  %v597 = vpop.f32.mrb[0].mxu0
  %v598 = vpop.f32.mrb[0].mxu0
  %v599 = vadd.f32 0.0, %v598
  %v600 = vpop.f32.mrb[0].mxu0
  %601 = vmatprep.mubr.bf16.mxu0 0
  %602 = vmatmul.mubr.bf16.gmra.mrb[0].mxu0 %v334
  %v603 = vpop.f32.mrb[0].mxu0
  %v604 = vadd.f32 0.0, %v603
  %v605 = vpop.f32.mrb[0].mxu0
  %v606 = vpop.f32.mrb[0].mxu0
  %v607 = vadd.f32 0.0, %v606
  %v608 = vpop.f32.mrb[0].mxu0
  %609 = vmatprep.mubr.bf16.mxu0 0
  %610 = vmatmul.mubr.bf16.gmra.mrb[0].mxu0 %v337
  %v611 = vpop.f32.mrb[0].mxu0
  %v612 = vadd.f32 0.0, %v611
  %v613 = vpop.f32.mrb[0].mxu0
  %v614 = vpop.f32.mrb[0].mxu0
  %v615 = vadd.f32 0.0, %v614
  %v616 = vpop.f32.mrb[0].mxu0
  %617 = vmatprep.mubr.bf16.mxu0 0
  %618 = vmatmul.mubr.bf16.gmra.mrb[0].mxu0 %v340
  %v619 = vpop.f32.mrb[0].mxu0
  %v620 = vadd.f32 0.0, %v619
  %v621 = vpop.f32.mrb[0].mxu0
  %v622 = vpop.f32.mrb[0].mxu0
  %v623 = vadd.f32 0.0, %v622
  %v624 = vpop.f32.mrb[0].mxu0
  %625 = vmatprep.mubr.bf16.mxu0 0
  %626 = vmatmul.mubr.bf16.gmra.mrb[0].mxu0 %v343
  %v627 = vpop.f32.mrb[0].mxu0
  %v628 = vadd.f32 0.0, %v627
  %v629 = vpop.f32.mrb[0].mxu0
  %v630 = vpop.f32.mrb[0].mxu0
  %v631 = vadd.f32 0.0, %v630
  %v632 = vpop.f32.mrb[0].mxu0
  %633 = vdwg.mxu0
  %v634 = vlaneseq
  %v635 = vshrl.u32 %v634, 7
  %v636 = vsub.s32 0, %v635
  %v637 = vrot.slane %v380, %v636
  %v638 = vsub.f32 %v380, %v637
  %v639 = vsub.f32 %v383, %v637
  %v640 = vsub.f32 %v388, %v637
  %v641 = vsub.f32 %v391, %v637
  %v642 = vsub.f32 %v396, %v637
  %v643 = vsub.f32 %v399, %v637
  %v644 = vsub.f32 %v404, %v637
  %v645 = vsub.f32 %v407, %v637
  %v646 = vsub.f32 %v412, %v637
  %v647 = vsub.f32 %v415, %v637
  %v648 = vsub.f32 %v420, %v637
  %v649 = vsub.f32 %v423, %v637
  %v650 = vsub.f32 %v428, %v637
  %v651 = vsub.f32 %v431, %v637
  %v652 = vsub.f32 %v436, %v637
  %v653 = vsub.f32 %v439, %v637
  %v654 = vsub.f32 %v444, %v637
  %v655 = vsub.f32 %v447, %v637
  %v656 = vsub.f32 %v452, %v637
  %v657 = vsub.f32 %v455, %v637
  %v658 = vsub.f32 %v460, %v637
  %v659 = vsub.f32 %v463, %v637
  %v660 = vsub.f32 %v468, %v637
  %v661 = vsub.f32 %v471, %v637
  %v662 = vsub.f32 %v476, %v637
  %v663 = vsub.f32 %v479, %v637
  %v664 = vsub.f32 %v484, %v637
  %v665 = vsub.f32 %v487, %v637
  %v666 = vsub.f32 %v492, %v637
  %v667 = vsub.f32 %v495, %v637
  %v668 = vsub.f32 %v500, %v637
  %v669 = vsub.f32 %v503, %v637
  %v670 = vsub.f32 %v508, %v637
  %v671 = vsub.f32 %v511, %v637
  %v672 = vsub.f32 %v516, %v637
  %v673 = vsub.f32 %v519, %v637
  %v674 = vsub.f32 %v524, %v637
  %v675 = vsub.f32 %v527, %v637
  %v676 = vsub.f32 %v532, %v637
  %v677 = vsub.f32 %v535, %v637
  %v678 = vsub.f32 %v540, %v637
  %v679 = vsub.f32 %v543, %v637
  %v680 = vsub.f32 %v548, %v637
  %v681 = vsub.f32 %v551, %v637
  %v682 = vsub.f32 %v556, %v637
  %v683 = vsub.f32 %v559, %v637
  %v684 = vsub.f32 %v564, %v637
  %v685 = vsub.f32 %v567, %v637
  %v686 = vsub.f32 %v572, %v637
  %v687 = vsub.f32 %v575, %v637
  %v688 = vsub.f32 %v580, %v637
  %v689 = vsub.f32 %v583, %v637
  %v690 = vsub.f32 %v588, %v637
  %v691 = vsub.f32 %v591, %v637
  %v692 = vsub.f32 %v596, %v637
  %v693 = vsub.f32 %v599, %v637
  %v694 = vsub.f32 %v604, %v637
  %v695 = vsub.f32 %v607, %v637
  %v696 = vsub.f32 %v612, %v637
  %v697 = vsub.f32 %v615, %v637
  %v698 = vsub.f32 %v620, %v637
  %v699 = vsub.f32 %v623, %v637
  %v700 = vsub.f32 %v628, %v637
  %v701 = vsub.f32 %v631, %v637
  %v702 = vmul.f32 %v638, %v638
  %v703 = vmul.f32 %v639, %v639
  %v704 = vmul.f32 %v640, %v640
  %v705 = vmul.f32 %v641, %v641
  %v706 = vmul.f32 %v642, %v642
  %v707 = vmul.f32 %v643, %v643
  %v708 = vmul.f32 %v644, %v644
  %v709 = vmul.f32 %v645, %v645
  %v710 = vmul.f32 %v646, %v646
  %v711 = vmul.f32 %v647, %v647
  %v712 = vmul.f32 %v648, %v648
  %v713 = vmul.f32 %v649, %v649
  %v714 = vmul.f32 %v650, %v650
  %v715 = vmul.f32 %v651, %v651
  %v716 = vmul.f32 %v652, %v652
  %v717 = vmul.f32 %v653, %v653
  %v718 = vmul.f32 %v654, %v654
  %v719 = vmul.f32 %v655, %v655
  %v720 = vmul.f32 %v656, %v656
  %v721 = vmul.f32 %v657, %v657
  %v722 = vmul.f32 %v658, %v658
  %v723 = vmul.f32 %v659, %v659
  %v724 = vmul.f32 %v660, %v660
  %v725 = vmul.f32 %v661, %v661
  %v726 = vmul.f32 %v662, %v662
  %v727 = vmul.f32 %v663, %v663
  %v728 = vmul.f32 %v664, %v664
  %v729 = vmul.f32 %v665, %v665
  %v730 = vmul.f32 %v666, %v666
  %v731 = vmul.f32 %v667, %v667
  %v732 = vmul.f32 %v668, %v668
  %v733 = vmul.f32 %v669, %v669
  %v734 = vmul.f32 %v670, %v670
  %v735 = vmul.f32 %v671, %v671
  %v736 = vmul.f32 %v672, %v672
  %v737 = vmul.f32 %v673, %v673
  %v738 = vmul.f32 %v674, %v674
  %v739 = vmul.f32 %v675, %v675
  %v740 = vmul.f32 %v676, %v676
  %v741 = vmul.f32 %v677, %v677
  %v742 = vmul.f32 %v678, %v678
  %v743 = vmul.f32 %v679, %v679
  %v744 = vmul.f32 %v680, %v680
  %v745 = vmul.f32 %v681, %v681
  %v746 = vmul.f32 %v682, %v682
  %v747 = vmul.f32 %v683, %v683
  %v748 = vmul.f32 %v684, %v684
  %v749 = vmul.f32 %v685, %v685
  %v750 = vmul.f32 %v686, %v686
  %v751 = vmul.f32 %v687, %v687
  %v752 = vmul.f32 %v688, %v688
  %v753 = vmul.f32 %v689, %v689
  %v754 = vmul.f32 %v690, %v690
  %v755 = vmul.f32 %v691, %v691
  %v756 = vmul.f32 %v692, %v692
  %v757 = vmul.f32 %v693, %v693
  %v758 = vmul.f32 %v694, %v694
  %v759 = vmul.f32 %v695, %v695
  %v760 = vmul.f32 %v696, %v696
  %v761 = vmul.f32 %v697, %v697
  %v762 = vmul.f32 %v698, %v698
  %v763 = vmul.f32 %v699, %v699
  %v764 = vmul.f32 %v700, %v700
  %v765 = vmul.f32 %v701, %v701
  %830 = vrot.lane.b32.xlu0 %v702, 32
  %v831 = vpop.permute.xlu0 %830
  %832 = vrot.lane.b32.xlu0 %v703, 32
  %v833 = vpop.permute.xlu0 %832
  %834 = vrot.lane.b32.xlu0 %v704, 32
  %v835 = vpop.permute.xlu0 %834
  %836 = vrot.lane.b32.xlu0 %v705, 32
  %v837 = vpop.permute.xlu0 %836
  %838 = vrot.lane.b32.xlu0 %v706, 32
  %v839 = vpop.permute.xlu0 %838
  %840 = vrot.lane.b32.xlu0 %v707, 32
  %v841 = vpop.permute.xlu0 %840
  %842 = vrot.lane.b32.xlu0 %v708, 32
  %v843 = vpop.permute.xlu0 %842
  %844 = vrot.lane.b32.xlu0 %v709, 32
  %v845 = vpop.permute.xlu0 %844
  %846 = vrot.lane.b32.xlu0 %v710, 32
  %v847 = vpop.permute.xlu0 %846
  %848 = vrot.lane.b32.xlu0 %v711, 32
  %v849 = vpop.permute.xlu0 %848
  %850 = vrot.lane.b32.xlu0 %v712, 32
  %v851 = vpop.permute.xlu0 %850
  %852 = vrot.lane.b32.xlu0 %v713, 32
  %v853 = vpop.permute.xlu0 %852
  %854 = vrot.lane.b32.xlu0 %v714, 32
  %v855 = vpop.permute.xlu0 %854
  %856 = vrot.lane.b32.xlu0 %v715, 32
  %v857 = vpop.permute.xlu0 %856
  %858 = vrot.lane.b32.xlu0 %v716, 32
  %v859 = vpop.permute.xlu0 %858
  %860 = vrot.lane.b32.xlu0 %v717, 32
  %v861 = vpop.permute.xlu0 %860
  %862 = vrot.lane.b32.xlu0 %v718, 32
  %v863 = vpop.permute.xlu0 %862
  %864 = vrot.lane.b32.xlu0 %v719, 32
  %v865 = vpop.permute.xlu0 %864
  %866 = vrot.lane.b32.xlu0 %v720, 32
  %v867 = vpop.permute.xlu0 %866
  %868 = vrot.lane.b32.xlu0 %v721, 32
  %v869 = vpop.permute.xlu0 %868
  %870 = vrot.lane.b32.xlu0 %v722, 32
  %v871 = vpop.permute.xlu0 %870
  %872 = vrot.lane.b32.xlu0 %v723, 32
  %v873 = vpop.permute.xlu0 %872
  %874 = vrot.lane.b32.xlu0 %v724, 32
  %v875 = vpop.permute.xlu0 %874
  %876 = vrot.lane.b32.xlu0 %v725, 32
  %v877 = vpop.permute.xlu0 %876
  %878 = vrot.lane.b32.xlu0 %v726, 32
  %v879 = vpop.permute.xlu0 %878
  %880 = vrot.lane.b32.xlu0 %v727, 32
  %v881 = vpop.permute.xlu0 %880
  %882 = vrot.lane.b32.xlu0 %v728, 32
  %v883 = vpop.permute.xlu0 %882
  %884 = vrot.lane.b32.xlu0 %v729, 32
  %v885 = vpop.permute.xlu0 %884
  %886 = vrot.lane.b32.xlu0 %v730, 32
  %v887 = vpop.permute.xlu0 %886
  %888 = vrot.lane.b32.xlu0 %v731, 32
  %v889 = vpop.permute.xlu0 %888
  %890 = vrot.lane.b32.xlu0 %v732, 32
  %v891 = vpop.permute.xlu0 %890
  %892 = vrot.lane.b32.xlu0 %v733, 32
  %v893 = vpop.permute.xlu0 %892
  %894 = vrot.lane.b32.xlu0 %v734, 32
  %v895 = vpop.permute.xlu0 %894
  %896 = vrot.lane.b32.xlu0 %v735, 32
  %v897 = vpop.permute.xlu0 %896
  %898 = vrot.lane.b32.xlu0 %v736, 32
  %v899 = vpop.permute.xlu0 %898
  %900 = vrot.lane.b32.xlu0 %v737, 32
  %v901 = vpop.permute.xlu0 %900
  %902 = vrot.lane.b32.xlu0 %v738, 32
  %v903 = vpop.permute.xlu0 %902
  %904 = vrot.lane.b32.xlu0 %v739, 32
  %v905 = vpop.permute.xlu0 %904
  %906 = vrot.lane.b32.xlu0 %v740, 32
  %v907 = vpop.permute.xlu0 %906
  %908 = vrot.lane.b32.xlu0 %v741, 32
  %v909 = vpop.permute.xlu0 %908
  %910 = vrot.lane.b32.xlu0 %v742, 32
  %v911 = vpop.permute.xlu0 %910
  %912 = vrot.lane.b32.xlu0 %v743, 32
  %v913 = vpop.permute.xlu0 %912
  %914 = vrot.lane.b32.xlu0 %v744, 32
  %v915 = vpop.permute.xlu0 %914
  %916 = vrot.lane.b32.xlu0 %v745, 32
  %v917 = vpop.permute.xlu0 %916
  %918 = vrot.lane.b32.xlu0 %v746, 32
  %v919 = vpop.permute.xlu0 %918
  %920 = vrot.lane.b32.xlu0 %v747, 32
  %v921 = vpop.permute.xlu0 %920
  %922 = vrot.lane.b32.xlu0 %v748, 32
  %v923 = vpop.permute.xlu0 %922
  %924 = vrot.lane.b32.xlu0 %v749, 32
  %v925 = vpop.permute.xlu0 %924
  %926 = vrot.lane.b32.xlu0 %v750, 32
  %v927 = vpop.permute.xlu0 %926
  %928 = vrot.lane.b32.xlu0 %v751, 32
  %v929 = vpop.permute.xlu0 %928
  %930 = vrot.lane.b32.xlu0 %v752, 32
  %v931 = vpop.permute.xlu0 %930
  %932 = vrot.lane.b32.xlu0 %v753, 32
  %v933 = vpop.permute.xlu0 %932
  %934 = vrot.lane.b32.xlu0 %v754, 32
  %v935 = vpop.permute.xlu0 %934
  %936 = vrot.lane.b32.xlu0 %v755, 32
  %v937 = vpop.permute.xlu0 %936
  %938 = vrot.lane.b32.xlu0 %v756, 32
  %v939 = vpop.permute.xlu0 %938
  %940 = vrot.lane.b32.xlu0 %v757, 32
  %v941 = vpop.permute.xlu0 %940
  %942 = vrot.lane.b32.xlu0 %v758, 32
  %v943 = vpop.permute.xlu0 %942
  %944 = vrot.lane.b32.xlu0 %v759, 32
  %v945 = vpop.permute.xlu0 %944
  %946 = vrot.lane.b32.xlu0 %v760, 32
  %v947 = vpop.permute.xlu0 %946
  %948 = vrot.lane.b32.xlu0 %v761, 32
  %v949 = vpop.permute.xlu0 %948
  %950 = vrot.lane.b32.xlu0 %v762, 32
  %v951 = vpop.permute.xlu0 %950
  %952 = vrot.lane.b32.xlu0 %v763, 32
  %v953 = vpop.permute.xlu0 %952
  %954 = vrot.lane.b32.xlu0 %v764, 32
  %v955 = vpop.permute.xlu0 %954
  %956 = vrot.lane.b32.xlu0 %v765, 32
  %v957 = vpop.permute.xlu0 %956
  %vm1022 = vcmask 261120
  %v1023 = vsel %vm1022, %v638, %v831
  %v1024 = vsel %vm1022, %v639, %v833
  %v1025 = vsel %vm1022, %v640, %v835
  %v1026 = vsel %vm1022, %v641, %v837
  %v1027 = vsel %vm1022, %v642, %v839
  %v1028 = vsel %vm1022, %v643, %v841
  %v1029 = vsel %vm1022, %v644, %v843
  %v1030 = vsel %vm1022, %v645, %v845
  %v1031 = vsel %vm1022, %v646, %v847
  %v1032 = vsel %vm1022, %v647, %v849
  %v1033 = vsel %vm1022, %v648, %v851
  %v1034 = vsel %vm1022, %v649, %v853
  %v1035 = vsel %vm1022, %v650, %v855
  %v1036 = vsel %vm1022, %v651, %v857
  %v1037 = vsel %vm1022, %v652, %v859
  %v1038 = vsel %vm1022, %v653, %v861
  %v1039 = vsel %vm1022, %v654, %v863
  %v1040 = vsel %vm1022, %v655, %v865
  %v1041 = vsel %vm1022, %v656, %v867
  %v1042 = vsel %vm1022, %v657, %v869
  %v1043 = vsel %vm1022, %v658, %v871
  %v1044 = vsel %vm1022, %v659, %v873
  %v1045 = vsel %vm1022, %v660, %v875
  %v1046 = vsel %vm1022, %v661, %v877
  %v1047 = vsel %vm1022, %v662, %v879
  %v1048 = vsel %vm1022, %v663, %v881
  %v1049 = vsel %vm1022, %v664, %v883
  %v1050 = vsel %vm1022, %v665, %v885
  %v1051 = vsel %vm1022, %v666, %v887
  %v1052 = vsel %vm1022, %v667, %v889
  %v1053 = vsel %vm1022, %v668, %v891
  %v1054 = vsel %vm1022, %v669, %v893
  %v1055 = vsel %vm1022, %v670, %v895
  %v1056 = vsel %vm1022, %v671, %v897
  %v1057 = vsel %vm1022, %v672, %v899
  %v1058 = vsel %vm1022, %v673, %v901
  %v1059 = vsel %vm1022, %v674, %v903
  %v1060 = vsel %vm1022, %v675, %v905
  %v1061 = vsel %vm1022, %v676, %v907
  %v1062 = vsel %vm1022, %v677, %v909
  %v1063 = vsel %vm1022, %v678, %v911
  %v1064 = vsel %vm1022, %v679, %v913
  %v1065 = vsel %vm1022, %v680, %v915
  %v1066 = vsel %vm1022, %v681, %v917
  %v1067 = vsel %vm1022, %v682, %v919
  %v1068 = vsel %vm1022, %v683, %v921
  %v1069 = vsel %vm1022, %v684, %v923
  %v1070 = vsel %vm1022, %v685, %v925
  %v1071 = vsel %vm1022, %v686, %v927
  %v1072 = vsel %vm1022, %v687, %v929
  %v1073 = vsel %vm1022, %v688, %v931
  %v1074 = vsel %vm1022, %v689, %v933
  %v1075 = vsel %vm1022, %v690, %v935
  %v1076 = vsel %vm1022, %v691, %v937
  %v1077 = vsel %vm1022, %v692, %v939
  %v1078 = vsel %vm1022, %v693, %v941
  %v1079 = vsel %vm1022, %v694, %v943
  %v1080 = vsel %vm1022, %v695, %v945
  %v1081 = vsel %vm1022, %v696, %v947
  %v1082 = vsel %vm1022, %v697, %v949
  %v1083 = vsel %vm1022, %v698, %v951
  %v1084 = vsel %vm1022, %v699, %v953
  %v1085 = vsel %vm1022, %v700, %v955
  %v1086 = vsel %vm1022, %v701, %v957
  %vm1087 = vcmask 523264
  %v1088 = vsel %vm1087, %v1023, 0.0
  %v1089 = vsel %vm1087, %v1024, 0.0
  %v1090 = vadd.f32 %v1088, %v1089
  %v1091 = vsel %vm1087, %v1025, 0.0
  %v1092 = vadd.f32 %v1090, %v1091
  %v1093 = vsel %vm1087, %v1026, 0.0
  %v1094 = vadd.f32 %v1092, %v1093
  %v1095 = vsel %vm1087, %v1027, 0.0
  %v1096 = vadd.f32 %v1094, %v1095
  %v1097 = vsel %vm1087, %v1028, 0.0
  %v1098 = vadd.f32 %v1096, %v1097
  %v1099 = vsel %vm1087, %v1029, 0.0
  %v1100 = vadd.f32 %v1098, %v1099
  %v1101 = vsel %vm1087, %v1030, 0.0
  %v1102 = vadd.f32 %v1100, %v1101
  %v1103 = vsel %vm1087, %v1031, 0.0
  %v1104 = vadd.f32 %v1102, %v1103
  %v1105 = vsel %vm1087, %v1032, 0.0
  %v1106 = vadd.f32 %v1104, %v1105
  %v1107 = vsel %vm1087, %v1033, 0.0
  %v1108 = vadd.f32 %v1106, %v1107
  %v1109 = vsel %vm1087, %v1034, 0.0
  %v1110 = vadd.f32 %v1108, %v1109
  %v1111 = vsel %vm1087, %v1035, 0.0
  %v1112 = vadd.f32 %v1110, %v1111
  %v1113 = vsel %vm1087, %v1036, 0.0
  %v1114 = vadd.f32 %v1112, %v1113
  %v1115 = vsel %vm1087, %v1037, 0.0
  %v1116 = vadd.f32 %v1114, %v1115
  %v1117 = vsel %vm1087, %v1038, 0.0
  %v1118 = vadd.f32 %v1116, %v1117
  %v1119 = vsel %vm1087, %v1039, 0.0
  %v1120 = vadd.f32 %v1118, %v1119
  %v1121 = vsel %vm1087, %v1040, 0.0
  %v1122 = vadd.f32 %v1120, %v1121
  %v1123 = vsel %vm1087, %v1041, 0.0
  %v1124 = vadd.f32 %v1122, %v1123
  %v1125 = vsel %vm1087, %v1042, 0.0
  %v1126 = vadd.f32 %v1124, %v1125
  %v1127 = vsel %vm1087, %v1043, 0.0
  %v1128 = vadd.f32 %v1126, %v1127
  %v1129 = vsel %vm1087, %v1044, 0.0
  %v1130 = vadd.f32 %v1128, %v1129
  %v1131 = vsel %vm1087, %v1045, 0.0
  %v1132 = vadd.f32 %v1130, %v1131
  %v1133 = vsel %vm1087, %v1046, 0.0
  %v1134 = vadd.f32 %v1132, %v1133
  %v1135 = vsel %vm1087, %v1047, 0.0
  %v1136 = vadd.f32 %v1134, %v1135
  %v1137 = vsel %vm1087, %v1048, 0.0
  %v1138 = vadd.f32 %v1136, %v1137
  %v1139 = vsel %vm1087, %v1049, 0.0
  %v1140 = vadd.f32 %v1138, %v1139
  %v1141 = vsel %vm1087, %v1050, 0.0
  %v1142 = vadd.f32 %v1140, %v1141
  %v1143 = vsel %vm1087, %v1051, 0.0
  %v1144 = vadd.f32 %v1142, %v1143
  %v1145 = vsel %vm1087, %v1052, 0.0
  %v1146 = vadd.f32 %v1144, %v1145
  %v1147 = vsel %vm1087, %v1053, 0.0
  %v1148 = vadd.f32 %v1146, %v1147
  %v1149 = vsel %vm1087, %v1054, 0.0
  %v1150 = vadd.f32 %v1148, %v1149
  %v1151 = vsel %vm1087, %v1055, 0.0
  %v1152 = vadd.f32 %v1150, %v1151
  %v1153 = vsel %vm1087, %v1056, 0.0
  %v1154 = vadd.f32 %v1152, %v1153
  %v1155 = vsel %vm1087, %v1057, 0.0
  %v1156 = vadd.f32 %v1154, %v1155
  %v1157 = vsel %vm1087, %v1058, 0.0
  %v1158 = vadd.f32 %v1156, %v1157
  %v1159 = vsel %vm1087, %v1059, 0.0
  %v1160 = vadd.f32 %v1158, %v1159
  %v1161 = vsel %vm1087, %v1060, 0.0
  %v1162 = vadd.f32 %v1160, %v1161
  %v1163 = vsel %vm1087, %v1061, 0.0
  %v1164 = vadd.f32 %v1162, %v1163
  %v1165 = vsel %vm1087, %v1062, 0.0
  %v1166 = vadd.f32 %v1164, %v1165
  %v1167 = vsel %vm1087, %v1063, 0.0
  %v1168 = vadd.f32 %v1166, %v1167
  %v1169 = vsel %vm1087, %v1064, 0.0
  %v1170 = vadd.f32 %v1168, %v1169
  %v1171 = vsel %vm1087, %v1065, 0.0
  %v1172 = vadd.f32 %v1170, %v1171
  %v1173 = vsel %vm1087, %v1066, 0.0
  %v1174 = vadd.f32 %v1172, %v1173
  %v1175 = vsel %vm1087, %v1067, 0.0
  %v1176 = vadd.f32 %v1174, %v1175
  %v1177 = vsel %vm1087, %v1068, 0.0
  %v1178 = vadd.f32 %v1176, %v1177
  %v1179 = vsel %vm1087, %v1069, 0.0
  %v1180 = vadd.f32 %v1178, %v1179
  %v1181 = vsel %vm1087, %v1070, 0.0
  %v1182 = vadd.f32 %v1180, %v1181
  %v1183 = vsel %vm1087, %v1071, 0.0
  %v1184 = vadd.f32 %v1182, %v1183
  %v1185 = vsel %vm1087, %v1072, 0.0
  %v1186 = vadd.f32 %v1184, %v1185
  %v1187 = vsel %vm1087, %v1073, 0.0
  %v1188 = vadd.f32 %v1186, %v1187
  %v1189 = vsel %vm1087, %v1074, 0.0
  %v1190 = vadd.f32 %v1188, %v1189
  %v1191 = vsel %vm1087, %v1075, 0.0
  %v1192 = vadd.f32 %v1190, %v1191
  %v1193 = vsel %vm1087, %v1076, 0.0
  %v1194 = vadd.f32 %v1192, %v1193
  %v1195 = vsel %vm1087, %v1077, 0.0
  %v1196 = vadd.f32 %v1194, %v1195
  %v1197 = vsel %vm1087, %v1078, 0.0
  %v1198 = vadd.f32 %v1196, %v1197
  %v1199 = vsel %vm1087, %v1079, 0.0
  %v1200 = vadd.f32 %v1198, %v1199
  %v1201 = vsel %vm1087, %v1080, 0.0
  %v1202 = vadd.f32 %v1200, %v1201
  %v1203 = vsel %vm1087, %v1081, 0.0
  %v1204 = vadd.f32 %v1202, %v1203
  %v1205 = vsel %vm1087, %v1082, 0.0
  %v1206 = vadd.f32 %v1204, %v1205
  %v1207 = vsel %vm1087, %v1083, 0.0
  %v1208 = vadd.f32 %v1206, %v1207
  %v1209 = vsel %vm1087, %v1084, 0.0
  %v1210 = vadd.f32 %v1208, %v1209
  %v1211 = vsel %vm1087, %v1085, 0.0
  %v1212 = vadd.f32 %v1210, %v1211
  %v1213 = vsel %vm1087, %v1086, 0.0
  %v1214 = vadd.f32 %v1212, %v1213
  %v1215 = vrot.slane %v1214, 4
  %v1216 = vadd.f32 %v1214, %v1215
  %v1217 = vrot.slane %v1216, 2
  %v1218 = vadd.f32 %v1216, %v1217
  %v1219 = vrot.slane %v1218, 1
  %v1220 = vadd.f32 %v1218, %v1219
  %v1221 = vrcp.pop 512.0
  %v1222 = vmul.f32 %v1220, %v1221
  %v1223 = vadd.f32 %v1222, %v380
  %v1224 = vmul.f32 %v1222, %v1222
  %1226 = vrot.lane.b32.xlu0 %v1224, 32
  %v1227 = vpop.permute.xlu0 %1226
  %v1229 = vsub.f32 %v1222, %v1227
  %v1230 = vmax.f32 %v1229, 0.0
  %v1231 = vlaneseq
  %v1232 = vshrl.u32 %v1231, 7
  %v1233 = vsub.s32 0, %v1232
  %v1234 = vrot.slane %v1223, %v1233
  %v1235 = vsub.f32 %v380, %v1234
  %v1236 = vsub.f32 %v383, %v1234
  %v1237 = vsub.f32 %v388, %v1234
  %v1238 = vsub.f32 %v391, %v1234
  %v1239 = vsub.f32 %v396, %v1234
  %v1240 = vsub.f32 %v399, %v1234
  %v1241 = vsub.f32 %v404, %v1234
  %v1242 = vsub.f32 %v407, %v1234
  %v1243 = vsub.f32 %v412, %v1234
  %v1244 = vsub.f32 %v415, %v1234
  %v1245 = vsub.f32 %v420, %v1234
  %v1246 = vsub.f32 %v423, %v1234
  %v1247 = vsub.f32 %v428, %v1234
  %v1248 = vsub.f32 %v431, %v1234
  %v1249 = vsub.f32 %v436, %v1234
  %v1250 = vsub.f32 %v439, %v1234
  %v1251 = vsub.f32 %v444, %v1234
  %v1252 = vsub.f32 %v447, %v1234
  %v1253 = vsub.f32 %v452, %v1234
  %v1254 = vsub.f32 %v455, %v1234
  %v1255 = vsub.f32 %v460, %v1234
  %v1256 = vsub.f32 %v463, %v1234
  %v1257 = vsub.f32 %v468, %v1234
  %v1258 = vsub.f32 %v471, %v1234
  %v1259 = vsub.f32 %v476, %v1234
  %v1260 = vsub.f32 %v479, %v1234
  %v1261 = vsub.f32 %v484, %v1234
  %v1262 = vsub.f32 %v487, %v1234
  %v1263 = vsub.f32 %v492, %v1234
  %v1264 = vsub.f32 %v495, %v1234
  %v1265 = vsub.f32 %v500, %v1234
  %v1266 = vsub.f32 %v503, %v1234
  %v1267 = vsub.f32 %v508, %v1234
  %v1268 = vsub.f32 %v511, %v1234
  %v1269 = vsub.f32 %v516, %v1234
  %v1270 = vsub.f32 %v519, %v1234
  %v1271 = vsub.f32 %v524, %v1234
  %v1272 = vsub.f32 %v527, %v1234
  %v1273 = vsub.f32 %v532, %v1234
  %v1274 = vsub.f32 %v535, %v1234
  %v1275 = vsub.f32 %v540, %v1234
  %v1276 = vsub.f32 %v543, %v1234
  %v1277 = vsub.f32 %v548, %v1234
  %v1278 = vsub.f32 %v551, %v1234
  %v1279 = vsub.f32 %v556, %v1234
  %v1280 = vsub.f32 %v559, %v1234
  %v1281 = vsub.f32 %v564, %v1234
  %v1282 = vsub.f32 %v567, %v1234
  %v1283 = vsub.f32 %v572, %v1234
  %v1284 = vsub.f32 %v575, %v1234
  %v1285 = vsub.f32 %v580, %v1234
  %v1286 = vsub.f32 %v583, %v1234
  %v1287 = vsub.f32 %v588, %v1234
  %v1288 = vsub.f32 %v591, %v1234
  %v1289 = vsub.f32 %v596, %v1234
  %v1290 = vsub.f32 %v599, %v1234
  %v1291 = vsub.f32 %v604, %v1234
  %v1292 = vsub.f32 %v607, %v1234
  %v1293 = vsub.f32 %v612, %v1234
  %v1294 = vsub.f32 %v615, %v1234
  %v1295 = vsub.f32 %v620, %v1234
  %v1296 = vsub.f32 %v623, %v1234
  %v1297 = vsub.f32 %v628, %v1234
  %v1298 = vsub.f32 %v631, %v1234
  %v1299 = vadd.f32 %v1230, 1e-05
  %v1300 = vrsqrt.pop %v1299
  %v1301 = vlaneseq
  %v1302 = vshrl.u32 %v1301, 7
  %v1303 = vsub.s32 0, %v1302
  %v1304 = vrot.slane %v1300, %v1303
  %1306 = vrot.lane.b32.xlu0 %v1304, 96
  %v1307 = vpop.permute.xlu0 %1306
  %v1309 = vmul.f32 %v1235, %v1307
  %v1310 = vmul.f32 %v1236, %v1307
  %v1311 = vmul.f32 %v1237, %v1307
  %v1312 = vmul.f32 %v1238, %v1307
  %v1313 = vmul.f32 %v1239, %v1307
  %v1314 = vmul.f32 %v1240, %v1307
  %v1315 = vmul.f32 %v1241, %v1307
  %v1316 = vmul.f32 %v1242, %v1307
  %v1317 = vmul.f32 %v1243, %v1307
  %v1318 = vmul.f32 %v1244, %v1307
  %v1319 = vmul.f32 %v1245, %v1307
  %v1320 = vmul.f32 %v1246, %v1307
  %v1321 = vmul.f32 %v1247, %v1307
  %v1322 = vmul.f32 %v1248, %v1307
  %v1323 = vmul.f32 %v1249, %v1307
  %v1324 = vmul.f32 %v1250, %v1307
  %v1325 = vmul.f32 %v1251, %v1307
  %v1326 = vmul.f32 %v1252, %v1307
  %v1327 = vmul.f32 %v1253, %v1307
  %v1328 = vmul.f32 %v1254, %v1307
  %v1329 = vmul.f32 %v1255, %v1307
  %v1330 = vmul.f32 %v1256, %v1307
  %v1331 = vmul.f32 %v1257, %v1307
  %v1332 = vmul.f32 %v1258, %v1307
  %v1333 = vmul.f32 %v1259, %v1307
  %v1334 = vmul.f32 %v1260, %v1307
  %v1335 = vmul.f32 %v1261, %v1307
  %v1336 = vmul.f32 %v1262, %v1307
  %v1337 = vmul.f32 %v1263, %v1307
  %v1338 = vmul.f32 %v1264, %v1307
  %v1339 = vmul.f32 %v1265, %v1307
  %v1340 = vmul.f32 %v1266, %v1307
  %v1341 = vmul.f32 %v1267, %v1307
  %v1342 = vmul.f32 %v1268, %v1307
  %v1343 = vmul.f32 %v1269, %v1307
  %v1344 = vmul.f32 %v1270, %v1307
  %v1345 = vmul.f32 %v1271, %v1307
  %v1346 = vmul.f32 %v1272, %v1307
  %v1347 = vmul.f32 %v1273, %v1307
  %v1348 = vmul.f32 %v1274, %v1307
  %v1349 = vmul.f32 %v1275, %v1307
  %v1350 = vmul.f32 %v1276, %v1307
  %v1351 = vmul.f32 %v1277, %v1307
  %v1352 = vmul.f32 %v1278, %v1307
  %v1353 = vmul.f32 %v1279, %v1307
  %v1354 = vmul.f32 %v1280, %v1307
  %v1355 = vmul.f32 %v1281, %v1307
  %v1356 = vmul.f32 %v1282, %v1307
  %v1357 = vmul.f32 %v1283, %v1307
  %v1358 = vmul.f32 %v1284, %v1307
  %v1359 = vmul.f32 %v1285, %v1307
  %v1360 = vmul.f32 %v1286, %v1307
  %v1361 = vmul.f32 %v1287, %v1307
  %v1362 = vmul.f32 %v1288, %v1307
  %v1363 = vmul.f32 %v1289, %v1307
  %v1364 = vmul.f32 %v1290, %v1307
  %v1365 = vmul.f32 %v1291, %v1307
  %v1366 = vmul.f32 %v1292, %v1307
  %v1367 = vmul.f32 %v1293, %v1307
  %v1368 = vmul.f32 %v1294, %v1307
  %v1369 = vmul.f32 %v1295, %v1307
  %v1370 = vmul.f32 %v1296, %v1307
  %v1371 = vmul.f32 %v1297, %v1307
  %v1372 = vmul.f32 %v1298, %v1307
  %v1373 = vld [vmem:[%s2] sm:$0x1]
  %v1374 = vlaneseq
  %v1375 = vshrl.u32 %v1374, 7
  %v1376 = vsub.s32 0, %v1375
  %v1377 = vrot.slane %v1373, %v1376
  %v1378 = vmul.f32 %v1309, %v1377
  %v1379 = vmul.f32 %v1310, %v1377
  %v1380 = vmul.f32 %v1311, %v1377
  %v1381 = vmul.f32 %v1312, %v1377
  %v1382 = vmul.f32 %v1313, %v1377
  %v1383 = vmul.f32 %v1314, %v1377
  %v1384 = vmul.f32 %v1315, %v1377
  %v1385 = vmul.f32 %v1316, %v1377
  %v1386 = vmul.f32 %v1317, %v1377
  %v1387 = vmul.f32 %v1318, %v1377
  %v1388 = vmul.f32 %v1319, %v1377
  %v1389 = vmul.f32 %v1320, %v1377
  %v1390 = vmul.f32 %v1321, %v1377
  %v1391 = vmul.f32 %v1322, %v1377
  %v1392 = vmul.f32 %v1323, %v1377
  %v1393 = vmul.f32 %v1324, %v1377
  %v1394 = vmul.f32 %v1325, %v1377
  %v1395 = vmul.f32 %v1326, %v1377
  %v1396 = vmul.f32 %v1327, %v1377
  %v1397 = vmul.f32 %v1328, %v1377
  %v1398 = vmul.f32 %v1329, %v1377
  %v1399 = vmul.f32 %v1330, %v1377
  %v1400 = vmul.f32 %v1331, %v1377
  %v1401 = vmul.f32 %v1332, %v1377
  %v1402 = vmul.f32 %v1333, %v1377
  %v1403 = vmul.f32 %v1334, %v1377
  %v1404 = vmul.f32 %v1335, %v1377
  %v1405 = vmul.f32 %v1336, %v1377
  %v1406 = vmul.f32 %v1337, %v1377
  %v1407 = vmul.f32 %v1338, %v1377
  %v1408 = vmul.f32 %v1339, %v1377
  %v1409 = vmul.f32 %v1340, %v1377
  %v1410 = vmul.f32 %v1341, %v1377
  %v1411 = vmul.f32 %v1342, %v1377
  %v1412 = vmul.f32 %v1343, %v1377
  %v1413 = vmul.f32 %v1344, %v1377
  %v1414 = vmul.f32 %v1345, %v1377
  %v1415 = vmul.f32 %v1346, %v1377
  %v1416 = vmul.f32 %v1347, %v1377
  %v1417 = vmul.f32 %v1348, %v1377
  %v1418 = vmul.f32 %v1349, %v1377
  %v1419 = vmul.f32 %v1350, %v1377
  %v1420 = vmul.f32 %v1351, %v1377
  %v1421 = vmul.f32 %v1352, %v1377
  %v1422 = vmul.f32 %v1353, %v1377
  %v1423 = vmul.f32 %v1354, %v1377
  %v1424 = vmul.f32 %v1355, %v1377
  %v1425 = vmul.f32 %v1356, %v1377
  %v1426 = vmul.f32 %v1357, %v1377
  %v1427 = vmul.f32 %v1358, %v1377
  %v1428 = vmul.f32 %v1359, %v1377
  %v1429 = vmul.f32 %v1360, %v1377
  %v1430 = vmul.f32 %v1361, %v1377
  %v1431 = vmul.f32 %v1362, %v1377
  %v1432 = vmul.f32 %v1363, %v1377
  %v1433 = vmul.f32 %v1364, %v1377
  %v1434 = vmul.f32 %v1365, %v1377
  %v1435 = vmul.f32 %v1366, %v1377
  %v1436 = vmul.f32 %v1367, %v1377
  %v1437 = vmul.f32 %v1368, %v1377
  %v1438 = vmul.f32 %v1369, %v1377
  %v1439 = vmul.f32 %v1370, %v1377
  %v1440 = vmul.f32 %v1371, %v1377
  %v1441 = vmul.f32 %v1372, %v1377
  %v1442 = vld [vmem:[%s2 + $0x1] sm:$0x1]
  %v1443 = vlaneseq
  %v1444 = vshrl.u32 %v1443, 7
  %v1445 = vsub.s32 0, %v1444
  %v1446 = vrot.slane %v1442, %v1445
  %v1447 = vadd.f32 %v1378, %v1446
  %v1448 = vadd.f32 %v1379, %v1446
  %v1449 = vadd.f32 %v1380, %v1446
  %v1450 = vadd.f32 %v1381, %v1446
  %v1451 = vadd.f32 %v1382, %v1446
  %v1452 = vadd.f32 %v1383, %v1446
  %v1453 = vadd.f32 %v1384, %v1446
  %v1454 = vadd.f32 %v1385, %v1446
  %v1455 = vadd.f32 %v1386, %v1446
  %v1456 = vadd.f32 %v1387, %v1446
  %v1457 = vadd.f32 %v1388, %v1446
  %v1458 = vadd.f32 %v1389, %v1446
  %v1459 = vadd.f32 %v1390, %v1446
  %v1460 = vadd.f32 %v1391, %v1446
  %v1461 = vadd.f32 %v1392, %v1446
  %v1462 = vadd.f32 %v1393, %v1446
  %v1463 = vadd.f32 %v1394, %v1446
  %v1464 = vadd.f32 %v1395, %v1446
  %v1465 = vadd.f32 %v1396, %v1446
  %v1466 = vadd.f32 %v1397, %v1446
  %v1467 = vadd.f32 %v1398, %v1446
  %v1468 = vadd.f32 %v1399, %v1446
  %v1469 = vadd.f32 %v1400, %v1446
  %v1470 = vadd.f32 %v1401, %v1446
  %v1471 = vadd.f32 %v1402, %v1446
  %v1472 = vadd.f32 %v1403, %v1446
  %v1473 = vadd.f32 %v1404, %v1446
  %v1474 = vadd.f32 %v1405, %v1446
  %v1475 = vadd.f32 %v1406, %v1446
  %v1476 = vadd.f32 %v1407, %v1446
  %v1477 = vadd.f32 %v1408, %v1446
  %v1478 = vadd.f32 %v1409, %v1446
  %v1479 = vadd.f32 %v1410, %v1446
  %v1480 = vadd.f32 %v1411, %v1446
  %v1481 = vadd.f32 %v1412, %v1446
  %v1482 = vadd.f32 %v1413, %v1446
  %v1483 = vadd.f32 %v1414, %v1446
  %v1484 = vadd.f32 %v1415, %v1446
  %v1485 = vadd.f32 %v1416, %v1446
  %v1486 = vadd.f32 %v1417, %v1446
  %v1487 = vadd.f32 %v1418, %v1446
  %v1488 = vadd.f32 %v1419, %v1446
  %v1489 = vadd.f32 %v1420, %v1446
  %v1490 = vadd.f32 %v1421, %v1446
  %v1491 = vadd.f32 %v1422, %v1446
  %v1492 = vadd.f32 %v1423, %v1446
  %v1493 = vadd.f32 %v1424, %v1446
  %v1494 = vadd.f32 %v1425, %v1446
  %v1495 = vadd.f32 %v1426, %v1446
  %v1496 = vadd.f32 %v1427, %v1446
  %v1497 = vadd.f32 %v1428, %v1446
  %v1498 = vadd.f32 %v1429, %v1446
  %v1499 = vadd.f32 %v1430, %v1446
  %v1500 = vadd.f32 %v1431, %v1446
  %v1501 = vadd.f32 %v1432, %v1446
  %v1502 = vadd.f32 %v1433, %v1446
  %v1503 = vadd.f32 %v1434, %v1446
  %v1504 = vadd.f32 %v1435, %v1446
  %v1505 = vadd.f32 %v1436, %v1446
  %v1506 = vadd.f32 %v1437, %v1446
  %v1507 = vadd.f32 %v1438, %v1446
  %v1508 = vadd.f32 %v1439, %v1446
  %v1509 = vadd.f32 %v1440, %v1446
  %v1510 = vadd.f32 %v1441, %v1446
  %v1511 = vmax.f32 %v1447, 0.0
  %v1512 = vmax.f32 %v1448, 0.0
  %v1513 = vmax.f32 %v1449, 0.0
  %v1514 = vmax.f32 %v1450, 0.0
  %v1515 = vmax.f32 %v1451, 0.0
  %v1516 = vmax.f32 %v1452, 0.0
  %v1517 = vmax.f32 %v1453, 0.0
  %v1518 = vmax.f32 %v1454, 0.0
  %v1519 = vmax.f32 %v1455, 0.0
  %v1520 = vmax.f32 %v1456, 0.0
  %v1521 = vmax.f32 %v1457, 0.0
  %v1522 = vmax.f32 %v1458, 0.0
  %v1523 = vmax.f32 %v1459, 0.0
  %v1524 = vmax.f32 %v1460, 0.0
  %v1525 = vmax.f32 %v1461, 0.0
  %v1526 = vmax.f32 %v1462, 0.0
  %v1527 = vmax.f32 %v1463, 0.0
  %v1528 = vmax.f32 %v1464, 0.0
  %v1529 = vmax.f32 %v1465, 0.0
  %v1530 = vmax.f32 %v1466, 0.0
  %v1531 = vmax.f32 %v1467, 0.0
  %v1532 = vmax.f32 %v1468, 0.0
  %v1533 = vmax.f32 %v1469, 0.0
  %v1534 = vmax.f32 %v1470, 0.0
  %v1535 = vmax.f32 %v1471, 0.0
  %v1536 = vmax.f32 %v1472, 0.0
  %v1537 = vmax.f32 %v1473, 0.0
  %v1538 = vmax.f32 %v1474, 0.0
  %v1539 = vmax.f32 %v1475, 0.0
  %v1540 = vmax.f32 %v1476, 0.0
  %v1541 = vmax.f32 %v1477, 0.0
  %v1542 = vmax.f32 %v1478, 0.0
  %v1543 = vmax.f32 %v1479, 0.0
  %v1544 = vmax.f32 %v1480, 0.0
  %v1545 = vmax.f32 %v1481, 0.0
  %v1546 = vmax.f32 %v1482, 0.0
  %v1547 = vmax.f32 %v1483, 0.0
  %v1548 = vmax.f32 %v1484, 0.0
  %v1549 = vmax.f32 %v1485, 0.0
  %v1550 = vmax.f32 %v1486, 0.0
  %v1551 = vmax.f32 %v1487, 0.0
  %v1552 = vmax.f32 %v1488, 0.0
  %v1553 = vmax.f32 %v1489, 0.0
  %v1554 = vmax.f32 %v1490, 0.0
  %v1555 = vmax.f32 %v1491, 0.0
  %v1556 = vmax.f32 %v1492, 0.0
  %v1557 = vmax.f32 %v1493, 0.0
  %v1558 = vmax.f32 %v1494, 0.0
  %v1559 = vmax.f32 %v1495, 0.0
  %v1560 = vmax.f32 %v1496, 0.0
  %v1561 = vmax.f32 %v1497, 0.0
  %v1562 = vmax.f32 %v1498, 0.0
  %v1563 = vmax.f32 %v1499, 0.0
  %v1564 = vmax.f32 %v1500, 0.0
  %v1565 = vmax.f32 %v1501, 0.0
  %v1566 = vmax.f32 %v1502, 0.0
  %v1567 = vmax.f32 %v1503, 0.0
  %v1568 = vmax.f32 %v1504, 0.0
  %v1569 = vmax.f32 %v1505, 0.0
  %v1570 = vmax.f32 %v1506, 0.0
  %v1571 = vmax.f32 %v1507, 0.0
  %v1572 = vmax.f32 %v1508, 0.0
  %v1573 = vmax.f32 %v1509, 0.0
  %v1574 = vmax.f32 %v1510, 0.0
  %v1575 = vlaneseq
  %v1576 = vshrl.u32 %v1575, 7
  %v1577 = vlaneseq
  %v1578 = vand.u32 %v1577, 127
  %v1579 = vadd.s32 %v1578, 128
  %v1580 = vadd.s32 %v1578, 256
  %v1581 = vadd.s32 %v1578, 384
  %v1582 = vmul.u32 %v1576, 256
  %vm1583 = vcmp.ge.s32.totalorder %v1578, %v1582
  %vm1584 = vcmp.ge.s32.totalorder %v1579, %v1582
  %vm1585 = vcmp.ge.s32.totalorder %v1580, %v1582
  %vm1586 = vcmp.ge.s32.totalorder %v1581, %v1582
  %v1587 = vadd.s32 %v1582, 256
  %vm1588 = vcmp.lt.s32.totalorder %v1578, %v1587
  %vm1589 = vcmp.lt.s32.totalorder %v1579, %v1587
  %vm1590 = vcmp.lt.s32.totalorder %v1580, %v1587
  %vm1591 = vcmp.lt.s32.totalorder %v1581, %v1587
  %vm1592 = vmand %vm1583, %vm1588
  %vm1593 = vmand %vm1584, %vm1589
  %vm1594 = vmand %vm1585, %vm1590
  %vm1595 = vmand %vm1586, %vm1591
  %v1596 = vsel %vm1592, 0.00390625, 0.0
  %v1597 = vsel %vm1593, 0.00390625, 0.0
  %v1598 = vsel %vm1594, 0.00390625, 0.0
  %v1599 = vsel %vm1595, 0.00390625, 0.0
  %1600 = vmatprep.subr.mxu0 0.0
  %1601 = vmatpush1.msra.mxu0 %v1511
  %1602 = vmatprep.subr.mxu0 0.0
  %1603 = vmatpush1.msra.mxu0 %v1512
  %1604 = vmatprep.subr.mxu0 0.0
  %1605 = vmatpush1.msra.mxu0 %v1513
  %1606 = vmatprep.subr.mxu0 0.0
  %1607 = vmatpush1.msra.mxu0 %v1514
  %1608 = vmatprep.subr.mxu0 0.0
  %1609 = vmatpush1.msra.mxu0 %v1515
  %1610 = vmatprep.subr.mxu0 0.0
  %1611 = vmatpush1.msra.mxu0 %v1516
  %1612 = vmatprep.subr.mxu0 0.0
  %1613 = vmatpush1.msra.mxu0 %v1517
  %1614 = vmatprep.subr.mxu0 0.0
  %1615 = vmatpush1.msra.mxu0 %v1518
  %1616 = vmatprep.subr.mxu0 0.0
  %1617 = vmatpush1.msra.mxu0 %v1519
  %1618 = vmatprep.subr.mxu0 0.0
  %1619 = vmatpush1.msra.mxu0 %v1520
  %1620 = vmatprep.subr.mxu0 0.0
  %1621 = vmatpush1.msra.mxu0 %v1521
  %1622 = vmatprep.subr.mxu0 0.0
  %1623 = vmatpush1.msra.mxu0 %v1522
  %1624 = vmatprep.subr.mxu0 0.0
  %1625 = vmatpush1.msra.mxu0 %v1523
  %1626 = vmatprep.subr.mxu0 0.0
  %1627 = vmatpush1.msra.mxu0 %v1524
  %1628 = vmatprep.subr.mxu0 0.0
  %1629 = vmatpush1.msra.mxu0 %v1525
  %1630 = vmatprep.subr.mxu0 0.0
  %1631 = vmatpush1.msra.mxu0 %v1526
  %1632 = vmatprep.subr.mxu0 0.0
  %1633 = vmatpush1.msra.mxu0 %v1527
  %1634 = vmatprep.subr.mxu0 0.0
  %1635 = vmatpush1.msra.mxu0 %v1528
  %1636 = vmatprep.subr.mxu0 0.0
  %1637 = vmatpush1.msra.mxu0 %v1529
  %1638 = vmatprep.subr.mxu0 0.0
  %1639 = vmatpush1.msra.mxu0 %v1530
  %1640 = vmatprep.subr.mxu0 0.0
  %1641 = vmatpush1.msra.mxu0 %v1531
  %1642 = vmatprep.subr.mxu0 0.0
  %1643 = vmatpush1.msra.mxu0 %v1532
  %1644 = vmatprep.subr.mxu0 0.0
  %1645 = vmatpush1.msra.mxu0 %v1533
  %1646 = vmatprep.subr.mxu0 0.0
  %1647 = vmatpush1.msra.mxu0 %v1534
  %1648 = vmatprep.subr.mxu0 0.0
  %1649 = vmatpush1.msra.mxu0 %v1535
  %1650 = vmatprep.subr.mxu0 0.0
  %1651 = vmatpush1.msra.mxu0 %v1536
  %1652 = vmatprep.subr.mxu0 0.0
  %1653 = vmatpush1.msra.mxu0 %v1537
  %1654 = vmatprep.subr.mxu0 0.0
  %1655 = vmatpush1.msra.mxu0 %v1538
  %1656 = vmatprep.subr.mxu0 0.0
  %1657 = vmatpush1.msra.mxu0 %v1539
  %1658 = vmatprep.subr.mxu0 0.0
  %1659 = vmatpush1.msra.mxu0 %v1540
  %1660 = vmatprep.subr.mxu0 0.0
  %1661 = vmatpush1.msra.mxu0 %v1541
  %1662 = vmatprep.subr.mxu0 0.0
  %1663 = vmatpush1.msra.mxu0 %v1542
  %1664 = vmatprep.mubr.f32.mxu0 %v1597
  %1665 = vmatmul.mubr.f32.gmra.mrb[0].mxu0 %v1596
  %v1666 = vpop.f32.mrb[0].mxu0
  %v1667 = vadd.f32 0.0, %v1666
  %v1668 = vpop.f32.mrb[0].mxu0
  %1669 = vdwg.mxu0
  %1670 = vmatprep.subr.mxu0 0.0
  %1671 = vmatpush1.msra.mxu0 %v1543
  %1672 = vmatprep.subr.mxu0 0.0
  %1673 = vmatpush1.msra.mxu0 %v1544
  %1674 = vmatprep.subr.mxu0 0.0
  %1675 = vmatpush1.msra.mxu0 %v1545
  %1676 = vmatprep.subr.mxu0 0.0
  %1677 = vmatpush1.msra.mxu0 %v1546
  %1678 = vmatprep.subr.mxu0 0.0
  %1679 = vmatpush1.msra.mxu0 %v1547
  %1680 = vmatprep.subr.mxu0 0.0
  %1681 = vmatpush1.msra.mxu0 %v1548
  %1682 = vmatprep.subr.mxu0 0.0
  %1683 = vmatpush1.msra.mxu0 %v1549
  %1684 = vmatprep.subr.mxu0 0.0
  %1685 = vmatpush1.msra.mxu0 %v1550
  %1686 = vmatprep.subr.mxu0 0.0
  %1687 = vmatpush1.msra.mxu0 %v1551
  %1688 = vmatprep.subr.mxu0 0.0
  %1689 = vmatpush1.msra.mxu0 %v1552
  %1690 = vmatprep.subr.mxu0 0.0
  %1691 = vmatpush1.msra.mxu0 %v1553
  %1692 = vmatprep.subr.mxu0 0.0
  %1693 = vmatpush1.msra.mxu0 %v1554
  %1694 = vmatprep.subr.mxu0 0.0
  %1695 = vmatpush1.msra.mxu0 %v1555
  %1696 = vmatprep.subr.mxu0 0.0
  %1697 = vmatpush1.msra.mxu0 %v1556
  %1698 = vmatprep.subr.mxu0 0.0
  %1699 = vmatpush1.msra.mxu0 %v1557
  %1700 = vmatprep.subr.mxu0 0.0
  %1701 = vmatpush1.msra.mxu0 %v1558
  %1702 = vmatprep.subr.mxu0 0.0
  %1703 = vmatpush1.msra.mxu0 %v1559
  %1704 = vmatprep.subr.mxu0 0.0
  %1705 = vmatpush1.msra.mxu0 %v1560
  %1706 = vmatprep.subr.mxu0 0.0
  %1707 = vmatpush1.msra.mxu0 %v1561
  %1708 = vmatprep.subr.mxu0 0.0
  %1709 = vmatpush1.msra.mxu0 %v1562
  %1710 = vmatprep.subr.mxu0 0.0
  %1711 = vmatpush1.msra.mxu0 %v1563
  %1712 = vmatprep.subr.mxu0 0.0
  %1713 = vmatpush1.msra.mxu0 %v1564
  %1714 = vmatprep.subr.mxu0 0.0
  %1715 = vmatpush1.msra.mxu0 %v1565
  %1716 = vmatprep.subr.mxu0 0.0
  %1717 = vmatpush1.msra.mxu0 %v1566
  %1718 = vmatprep.subr.mxu0 0.0
  %1719 = vmatpush1.msra.mxu0 %v1567
  %1720 = vmatprep.subr.mxu0 0.0
  %1721 = vmatpush1.msra.mxu0 %v1568
  %1722 = vmatprep.subr.mxu0 0.0
  %1723 = vmatpush1.msra.mxu0 %v1569
  %1724 = vmatprep.subr.mxu0 0.0
  %1725 = vmatpush1.msra.mxu0 %v1570
  %1726 = vmatprep.subr.mxu0 0.0
  %1727 = vmatpush1.msra.mxu0 %v1571
  %1728 = vmatprep.subr.mxu0 0.0
  %1729 = vmatpush1.msra.mxu0 %v1572
  %1730 = vmatprep.subr.mxu0 0.0
  %1731 = vmatpush1.msra.mxu0 %v1573
  %1732 = vmatprep.subr.mxu0 0.0
  %1733 = vmatpush1.msra.mxu0 %v1574
  %1734 = vmatprep.mubr.f32.mxu0 %v1599
  %1735 = vmatmul.mubr.f32.gmra.mrb[0].mxu0 %v1598
  %v1736 = vpop.f32.mrb[0].mxu0
  %v1737 = vadd.f32 %v1667, %v1736
  %v1738 = vpop.f32.mrb[0].mxu0
  %1739 = vdwg.mxu0
  %v1740 = vld [vmem:[%s1 + $0x30] sm:$0xff]
  %v1741 = vld [vmem:[%s1 + $0x38] sm:$0xff]
  %v1742 = vld [vmem:[%s1 + $0x40] sm:$0xff]
  %v1743 = vld [vmem:[%s1 + $0x48] sm:$0xff]
  %v1745 = vsel %vm1022, %v1737, 0
  %1747 = vmatprep.subr.mxu0 0.0
  %1748 = vmatpush1.msra.mxu0 %v1740
  %1749 = vmatprep.subr.mxu0 0.0
  %1750 = vmatpush1.msra.mxu0 %v1741
  %1751 = vmatprep.subr.mxu0 0.0
  %1752 = vmatpush1.msra.mxu0 %v1742
  %1753 = vmatprep.subr.mxu0 0.0
  %1754 = vmatpush1.msra.mxu0 %v1743
  %1755 = vmatprep.subr.mxu0 0.0
  %1756 = vmatpush1.msra.mxu0 0.0
  %1757 = vmatprep.subr.mxu0 0.0
  %1758 = vmatpush1.msra.mxu0 0.0
  %1759 = vmatprep.subr.mxu0 0.0
  %1760 = vmatpush1.msra.mxu0 0.0
  %1761 = vmatprep.subr.mxu0 0.0
  %1762 = vmatpush1.msra.mxu0 0.0
  %1763 = vmatprep.subr.mxu0 0.0
  %1764 = vmatpush1.msra.mxu0 0.0
  %1765 = vmatprep.subr.mxu0 0.0
  %1766 = vmatpush1.msra.mxu0 0.0
  %1767 = vmatprep.subr.mxu0 0.0
  %1768 = vmatpush1.msra.mxu0 0.0
  %1769 = vmatprep.subr.mxu0 0.0
  %1770 = vmatpush1.msra.mxu0 0.0
  %1771 = vmatprep.subr.mxu0 0.0
  %1772 = vmatpush1.msra.mxu0 0.0
  %1773 = vmatprep.subr.mxu0 0.0
  %1774 = vmatpush1.msra.mxu0 0.0
  %1775 = vmatprep.subr.mxu0 0.0
  %1776 = vmatpush1.msra.mxu0 0.0
  %1777 = vmatprep.subr.mxu0 0.0
  %1778 = vmatpush1.msra.mxu0 0.0
  %1779 = vmatprep.subr.mxu0 0.0
  %1780 = vmatpush1.msra.mxu0 0.0
  %1781 = vmatprep.subr.mxu0 0.0
  %1782 = vmatpush1.msra.mxu0 0.0
  %1783 = vmatprep.subr.mxu0 0.0
  %1784 = vmatpush1.msra.mxu0 0.0
  %1785 = vmatprep.subr.mxu0 0.0
  %1786 = vmatpush1.msra.mxu0 0.0
  %1787 = vmatprep.subr.mxu0 0.0
  %1788 = vmatpush1.msra.mxu0 0.0
  %1789 = vmatprep.subr.mxu0 0.0
  %1790 = vmatpush1.msra.mxu0 0.0
  %1791 = vmatprep.subr.mxu0 0.0
  %1792 = vmatpush1.msra.mxu0 0.0
  %1793 = vmatprep.subr.mxu0 0.0
  %1794 = vmatpush1.msra.mxu0 0.0
  %1795 = vmatprep.subr.mxu0 0.0
  %1796 = vmatpush1.msra.mxu0 0.0
  %1797 = vmatprep.subr.mxu0 0.0
  %1798 = vmatpush1.msra.mxu0 0.0
  %1799 = vmatprep.subr.mxu0 0.0
  %1800 = vmatpush1.msra.mxu0 0.0
  %1801 = vmatprep.subr.mxu0 0.0
  %1802 = vmatpush1.msra.mxu0 0.0
  %1803 = vmatprep.subr.mxu0 0.0
  %1804 = vmatpush1.msra.mxu0 0.0
  %1805 = vmatprep.subr.mxu0 0.0
  %1806 = vmatpush1.msra.mxu0 0.0
  %1807 = vmatprep.subr.mxu0 0.0
  %1808 = vmatpush1.msra.mxu0 0.0
  %1809 = vmatprep.subr.mxu0 0.0
  %1810 = vmatpush1.msra.mxu0 0.0
  %1811 = vmatprep.mubr.f32.mxu0 0.0
  %1812 = vmatmul.mubr.f32.gmra.mrb[0].mxu0 %v1745
  %v1813 = vpop.f32.mrb[0].mxu0
  %v1814 = vadd.f32 0.0, %v1813
  %v1815 = vpop.f32.mrb[0].mxu0
  %1816 = vdwg.mxu0
  %v1817 = vld [vmem:[%s2 + $0x2] sm:$0x1]
  %v1818 = vld [vmem:[%s2 + $0x3] sm:$0x1]
  %v1819 = vlaneseq
  %v1820 = vshrl.u32 %v1819, 7
  %v1821 = vsub.s32 0, %v1820
  %v1822 = vrot.slane %v1814, %v1821
  %v1823 = vsub.f32 %v1814, %v1822
  %v1824 = vmul.f32 %v1823, %v1823
  %1826 = vrot.lane.b32.xlu0 %v1824, 64
  %v1827 = vpop.permute.xlu0 %1826
  %v1829 = vsel %vm1087, %v1823, %v1827
  %vm1830 = vcmask 1041408
  %v1831 = vsel %vm1830, %v1829, 0.0
  %v1832 = vrot.slane %v1831, 4
  %v1833 = vadd.f32 %v1831, %v1832
  %v1834 = vrot.slane %v1833, 2
  %v1835 = vadd.f32 %v1833, %v1834
  %v1836 = vrot.slane %v1835, 1
  %v1837 = vadd.f32 %v1835, %v1836
  %v1838 = vrcp.pop 2.0
  %v1839 = vmul.f32 %v1837, %v1838
  %v1840 = vadd.f32 %v1839, %v1814
  %v1841 = vmul.f32 %v1839, %v1839
  %1843 = vrot.lane.b32.xlu0 %v1841, 64
  %v1844 = vpop.permute.xlu0 %1843
  %v1846 = vsub.f32 %v1839, %v1844
  %v1847 = vmax.f32 %v1846, 0.0
  %v1848 = vlaneseq
  %v1849 = vshrl.u32 %v1848, 7
  %v1850 = vsub.s32 0, %v1849
  %v1851 = vrot.slane %v1840, %v1850
  %v1852 = vsub.f32 %v1814, %v1851
  %v1853 = vadd.f32 %v1847, 1e-05
  %v1854 = vrsqrt.pop %v1853
  %v1855 = vlaneseq
  %v1856 = vshrl.u32 %v1855, 7
  %v1857 = vsub.s32 0, %v1856
  %v1858 = vrot.slane %v1854, %v1857
  %1860 = vrot.lane.b32.xlu0 %v1858, 64
  %v1861 = vpop.permute.xlu0 %1860
  %v1863 = vmul.f32 %v1852, %v1861
  %v1864 = vlaneseq
  %v1865 = vshrl.u32 %v1864, 7
  %v1866 = vsub.s32 0, %v1865
  %v1867 = vrot.slane %v1817, %v1866
  %v1868 = vmul.f32 %v1863, %v1867
  %v1869 = vlaneseq
  %v1870 = vshrl.u32 %v1869, 7
  %v1871 = vsub.s32 0, %v1870
  %v1872 = vrot.slane %v1818, %v1871
  %v1873 = vadd.f32 %v1868, %v1872
  %v1874 = vmax.f32 %v1873, 0.0
  %v1875 = vld [vmem:[%s1 + $0x50] sm:$0xff]
  %v1876 = vld [vmem:[%s1 + $0x58] sm:$0xff]
  %v1877 = vld [vmem:[%s1 + $0x60] sm:$0xff]
  %v1878 = vld [vmem:[%s1 + $0x68] sm:$0xff]
  %v1879 = vld [vmem:[%s1 + $0x70] sm:$0xff]
  %v1880 = vld [vmem:[%s1 + $0x78] sm:$0xff]
  %v1881 = vld [vmem:[%s1 + $0x80] sm:$0xff]
  %v1882 = vld [vmem:[%s1 + $0x88] sm:$0xff]
  %v1884 = vsel %vm1087, %v1874, 0
  %1886 = vmatprep.subr.mxu0 0.0
  %1887 = vmatpush1.msra.mxu0 %v1875
  %1888 = vmatprep.subr.mxu0 0.0
  %1889 = vmatpush1.msra.mxu0 %v1876
  %1890 = vmatprep.subr.mxu0 0.0
  %1891 = vmatpush1.msra.mxu0 %v1877
  %1892 = vmatprep.subr.mxu0 0.0
  %1893 = vmatpush1.msra.mxu0 %v1878
  %1894 = vmatprep.subr.mxu0 0.0
  %1895 = vmatpush1.msra.mxu0 %v1879
  %1896 = vmatprep.subr.mxu0 0.0
  %1897 = vmatpush1.msra.mxu0 %v1880
  %1898 = vmatprep.subr.mxu0 0.0
  %1899 = vmatpush1.msra.mxu0 %v1881
  %1900 = vmatprep.subr.mxu0 0.0
  %1901 = vmatpush1.msra.mxu0 %v1882
  %1902 = vmatprep.subr.mxu0 0.0
  %1903 = vmatpush1.msra.mxu0 0.0
  %1904 = vmatprep.subr.mxu0 0.0
  %1905 = vmatpush1.msra.mxu0 0.0
  %1906 = vmatprep.subr.mxu0 0.0
  %1907 = vmatpush1.msra.mxu0 0.0
  %1908 = vmatprep.subr.mxu0 0.0
  %1909 = vmatpush1.msra.mxu0 0.0
  %1910 = vmatprep.subr.mxu0 0.0
  %1911 = vmatpush1.msra.mxu0 0.0
  %1912 = vmatprep.subr.mxu0 0.0
  %1913 = vmatpush1.msra.mxu0 0.0
  %1914 = vmatprep.subr.mxu0 0.0
  %1915 = vmatpush1.msra.mxu0 0.0
  %1916 = vmatprep.subr.mxu0 0.0
  %1917 = vmatpush1.msra.mxu0 0.0
  %1918 = vmatprep.subr.mxu0 0.0
  %1919 = vmatpush1.msra.mxu0 0.0
  %1920 = vmatprep.subr.mxu0 0.0
  %1921 = vmatpush1.msra.mxu0 0.0
  %1922 = vmatprep.subr.mxu0 0.0
  %1923 = vmatpush1.msra.mxu0 0.0
  %1924 = vmatprep.subr.mxu0 0.0
  %1925 = vmatpush1.msra.mxu0 0.0
  %1926 = vmatprep.subr.mxu0 0.0
  %1927 = vmatpush1.msra.mxu0 0.0
  %1928 = vmatprep.subr.mxu0 0.0
  %1929 = vmatpush1.msra.mxu0 0.0
  %1930 = vmatprep.subr.mxu0 0.0
  %1931 = vmatpush1.msra.mxu0 0.0
  %1932 = vmatprep.subr.mxu0 0.0
  %1933 = vmatpush1.msra.mxu0 0.0
  %1934 = vmatprep.subr.mxu0 0.0
  %1935 = vmatpush1.msra.mxu0 0.0
  %1936 = vmatprep.subr.mxu0 0.0
  %1937 = vmatpush1.msra.mxu0 0.0
  %1938 = vmatprep.subr.mxu0 0.0
  %1939 = vmatpush1.msra.mxu0 0.0
  %1940 = vmatprep.subr.mxu0 0.0
  %1941 = vmatpush1.msra.mxu0 0.0
  %1942 = vmatprep.subr.mxu0 0.0
  %1943 = vmatpush1.msra.mxu0 0.0
  %1944 = vmatprep.subr.mxu0 0.0
  %1945 = vmatpush1.msra.mxu0 0.0
  %1946 = vmatprep.subr.mxu0 0.0
  %1947 = vmatpush1.msra.mxu0 0.0
  %1948 = vmatprep.subr.mxu0 0.0
  %1949 = vmatpush1.msra.mxu0 0.0
  %1950 = vmatprep.mubr.f32.mxu0 0.0
  %1951 = vmatmul.mubr.f32.gmra.mrb[0].mxu0 %v1884
  %v1952 = vpop.f32.mrb[0].mxu0
  %v1953 = vadd.f32 0.0, %v1952
  %v1954 = vpop.f32.mrb[0].mxu0
  %1955 = vdwg.mxu0
  %v1956 = vld [vmem:[%s2 + $0x4] sm:$0x1]
  %v1957 = vld [vmem:[%s2 + $0x5] sm:$0x1]
  %v1958 = vlaneseq
  %v1959 = vshrl.u32 %v1958, 7
  %v1960 = vsub.s32 0, %v1959
  %v1961 = vrot.slane %v1953, %v1960
  %v1962 = vsub.f32 %v1953, %v1961
  %v1963 = vmul.f32 %v1962, %v1962
  %1965 = vrot.lane.b32.xlu0 %v1963, 48
  %v1966 = vpop.permute.xlu0 %1965
  %v1968 = vsel %vm248, %v1962, %v1966
  %vm1969 = vcmask 779264
  %v1970 = vsel %vm1969, %v1968, 0.0
  %v1971 = vrot.slane %v1970, 4
  %v1972 = vadd.f32 %v1970, %v1971
  %v1973 = vrot.slane %v1972, 2
  %v1974 = vadd.f32 %v1972, %v1973
  %v1975 = vrot.slane %v1974, 1
  %v1976 = vadd.f32 %v1974, %v1975
  %v1977 = vmul.f32 %v1976, %v1838
  %v1978 = vadd.f32 %v1977, %v1953
  %v1979 = vmul.f32 %v1977, %v1977
  %1981 = vrot.lane.b32.xlu0 %v1979, 48
  %v1982 = vpop.permute.xlu0 %1981
  %v1984 = vsub.f32 %v1977, %v1982
  %v1985 = vmax.f32 %v1984, 0.0
  %v1986 = vlaneseq
  %v1987 = vshrl.u32 %v1986, 7
  %v1988 = vsub.s32 0, %v1987
  %v1989 = vrot.slane %v1978, %v1988
  %v1990 = vsub.f32 %v1953, %v1989
  %v1991 = vadd.f32 %v1985, 1e-05
  %v1992 = vrsqrt.pop %v1991
  %v1993 = vlaneseq
  %v1994 = vshrl.u32 %v1993, 7
  %v1995 = vsub.s32 0, %v1994
  %v1996 = vrot.slane %v1992, %v1995
  %1998 = vrot.lane.b32.xlu0 %v1996, 80
  %v1999 = vpop.permute.xlu0 %1998
  %v2001 = vmul.f32 %v1990, %v1999
  %v2002 = vlaneseq
  %v2003 = vshrl.u32 %v2002, 7
  %v2004 = vsub.s32 0, %v2003
  %v2005 = vrot.slane %v1956, %v2004
  %v2006 = vmul.f32 %v2001, %v2005
  %v2007 = vlaneseq
  %v2008 = vshrl.u32 %v2007, 7
  %v2009 = vsub.s32 0, %v2008
  %v2010 = vrot.slane %v1957, %v2009
  %v2011 = vadd.f32 %v2006, %v2010
  %v2012 = vmax.f32 %v2011, 0.0
  %v2013 = vld [vmem:[%s1 + $0x90] sm:$0xff]
  %v2014 = vld [vmem:[%s1 + $0x98] sm:$0xff]
  %v2015 = vld [vmem:[%s1 + $0xa0] sm:$0xff]
  %v2016 = vld [vmem:[%s1 + $0xa8] sm:$0xff]
  %v2017 = vld [vmem:[%s1 + $0xb0] sm:$0xff]
  %v2018 = vld [vmem:[%s1 + $0xb8] sm:$0xff]
  %v2019 = vld [vmem:[%s2 + $0x9] sm:$0x1]
  %v2020 = vlaneseq
  %v2021 = vshrl.u32 %v2020, 7
  %v2022 = vsub.s32 0, %v2021
  %v2023 = vrot.slane %v2019, %v2022
  %v2025 = vsel %vm248, %v2012, 0
  %2027 = vmatprep.subr.mxu0 0.0
  %2028 = vmatpush1.msra.mxu0 %v2013
  %2029 = vmatprep.subr.mxu0 0.0
  %2030 = vmatpush1.msra.mxu0 %v2014
  %2031 = vmatprep.subr.mxu0 0.0
  %2032 = vmatpush1.msra.mxu0 %v2015
  %2033 = vmatprep.subr.mxu0 0.0
  %2034 = vmatpush1.msra.mxu0 %v2016
  %2035 = vmatprep.subr.mxu0 0.0
  %2036 = vmatpush1.msra.mxu0 %v2017
  %2037 = vmatprep.subr.mxu0 0.0
  %2038 = vmatpush1.msra.mxu0 %v2018
  %2039 = vmatprep.subr.mxu0 0.0
  %2040 = vmatpush1.msra.mxu0 0.0
  %2041 = vmatprep.subr.mxu0 0.0
  %2042 = vmatpush1.msra.mxu0 0.0
  %2043 = vmatprep.subr.mxu0 0.0
  %2044 = vmatpush1.msra.mxu0 0.0
  %2045 = vmatprep.subr.mxu0 0.0
  %2046 = vmatpush1.msra.mxu0 0.0
  %2047 = vmatprep.subr.mxu0 0.0
  %2048 = vmatpush1.msra.mxu0 0.0
  %2049 = vmatprep.subr.mxu0 0.0
  %2050 = vmatpush1.msra.mxu0 0.0
  %2051 = vmatprep.subr.mxu0 0.0
  %2052 = vmatpush1.msra.mxu0 0.0
  %2053 = vmatprep.subr.mxu0 0.0
  %2054 = vmatpush1.msra.mxu0 0.0
  %2055 = vmatprep.subr.mxu0 0.0
  %2056 = vmatpush1.msra.mxu0 0.0
  %2057 = vmatprep.subr.mxu0 0.0
  %2058 = vmatpush1.msra.mxu0 0.0
  %2059 = vmatprep.subr.mxu0 0.0
  %2060 = vmatpush1.msra.mxu0 0.0
  %2061 = vmatprep.subr.mxu0 0.0
  %2062 = vmatpush1.msra.mxu0 0.0
  %2063 = vmatprep.subr.mxu0 0.0
  %2064 = vmatpush1.msra.mxu0 0.0
  %2065 = vmatprep.subr.mxu0 0.0
  %2066 = vmatpush1.msra.mxu0 0.0
  %2067 = vmatprep.subr.mxu0 0.0
  %2068 = vmatpush1.msra.mxu0 0.0
  %2069 = vmatprep.subr.mxu0 0.0
  %2070 = vmatpush1.msra.mxu0 0.0
  %2071 = vmatprep.subr.mxu0 0.0
  %2072 = vmatpush1.msra.mxu0 0.0
  %2073 = vmatprep.subr.mxu0 0.0
  %2074 = vmatpush1.msra.mxu0 0.0
  %2075 = vmatprep.subr.mxu0 0.0
  %2076 = vmatpush1.msra.mxu0 0.0
  %2077 = vmatprep.subr.mxu0 0.0
  %2078 = vmatpush1.msra.mxu0 0.0
  %2079 = vmatprep.subr.mxu0 0.0
  %2080 = vmatpush1.msra.mxu0 0.0
  %2081 = vmatprep.subr.mxu0 0.0
  %2082 = vmatpush1.msra.mxu0 0.0
  %2083 = vmatprep.subr.mxu0 0.0
  %2084 = vmatpush1.msra.mxu0 0.0
  %2085 = vmatprep.subr.mxu0 0.0
  %2086 = vmatpush1.msra.mxu0 0.0
  %2087 = vmatprep.subr.mxu0 0.0
  %2088 = vmatpush1.msra.mxu0 0.0
  %2089 = vmatprep.subr.mxu0 0.0
  %2090 = vmatpush1.msra.mxu0 0.0
  %2091 = vmatprep.mubr.f32.mxu0 0.0
  %2092 = vmatmul.mubr.f32.gmra.mrb[0].mxu0 %v2025
  %v2093 = vpop.f32.mrb[0].mxu0
  %v2094 = vadd.f32 %v2023, %v2093
  %v2095 = vpop.f32.mrb[0].mxu0
  %2096 = vdwg.mxu0
  %v2097 = vlaneseq
  %v2098 = vshrl.u32 %v2097, 7
  %v2099 = vsub.s32 0, %v2098
  %v2100 = vrot.slane %v2094, %v2099
  %v2101 = vsub.f32 %v2094, %v2100
  %v2102 = vmul.f32 %v2101, %v2101
  %2104 = vrot.lane.b32.xlu0 %v2102, 64
  %v2105 = vpop.permute.xlu0 %2104
  %v2107 = vsel %vm1087, %v2101, %v2105
  %v2108 = vsel %vm1830, %v2107, 0.0
  %v2109 = vrot.slane %v2108, 4
  %v2110 = vadd.f32 %v2108, %v2109
  %v2111 = vrot.slane %v2110, 2
  %v2112 = vadd.f32 %v2110, %v2111
  %v2113 = vrot.slane %v2112, 1
  %v2114 = vadd.f32 %v2112, %v2113
  %v2115 = vmul.f32 %v2114, %v1838
  %v2116 = vadd.f32 %v2115, %v2094
  %v2117 = vmul.f32 %v2115, %v2115
  %2119 = vrot.lane.b32.xlu0 %v2117, 64
  %v2120 = vpop.permute.xlu0 %2119
  %v2122 = vsub.f32 %v2115, %v2120
  %v2123 = vmax.f32 %v2122, 0.0
  %v2124 = vlaneseq
  %v2125 = vshrl.u32 %v2124, 7
  %v2126 = vsub.s32 0, %v2125
  %v2127 = vrot.slane %v2116, %v2126
  %v2128 = vsub.f32 %v2094, %v2127
  %v2129 = vadd.f32 %v2123, 1e-05
  %v2130 = vrsqrt.pop %v2129
  %v2131 = vlaneseq
  %v2132 = vshrl.u32 %v2131, 7
  %v2133 = vsub.s32 0, %v2132
  %v2134 = vrot.slane %v2130, %v2133
  %2136 = vrot.lane.b32.xlu0 %v2134, 64
  %v2137 = vpop.permute.xlu0 %2136
  %v2139 = vmul.f32 %v2128, %v2137
  %v2140 = vld [vmem:[%s1 + $0xc0] sm:$0xff]
  %v2141 = vld [vmem:[%s1 + $0xc8] sm:$0xff]
  %v2142 = vld [vmem:[%s1 + $0xd0] sm:$0xff]
  %v2143 = vld [vmem:[%s1 + $0xd8] sm:$0xff]
  %v2144 = vld [vmem:[%s1 + $0xe0] sm:$0xff]
  %v2145 = vld [vmem:[%s1 + $0xe8] sm:$0xff]
  %v2146 = vld [vmem:[%s1 + $0xf0] sm:$0xff]
  %v2147 = vld [vmem:[%s1 + $0xf8] sm:$0xff]
  %v2149 = vsel %vm1087, %v2139, 0
  %2151 = vmatprep.subr.mxu0 0.0
  %2152 = vmatpush1.msra.mxu0 %v2140
  %2153 = vmatprep.subr.mxu0 0.0
  %2154 = vmatpush1.msra.mxu0 %v2141
  %2155 = vmatprep.subr.mxu0 0.0
  %2156 = vmatpush1.msra.mxu0 %v2142
  %2157 = vmatprep.subr.mxu0 0.0
  %2158 = vmatpush1.msra.mxu0 %v2143
  %2159 = vmatprep.subr.mxu0 0.0
  %2160 = vmatpush1.msra.mxu0 %v2144
  %2161 = vmatprep.subr.mxu0 0.0
  %2162 = vmatpush1.msra.mxu0 %v2145
  %2163 = vmatprep.subr.mxu0 0.0
  %2164 = vmatpush1.msra.mxu0 %v2146
  %2165 = vmatprep.subr.mxu0 0.0
  %2166 = vmatpush1.msra.mxu0 %v2147
  %2167 = vmatprep.subr.mxu0 0.0
  %2168 = vmatpush1.msra.mxu0 0.0
  %2169 = vmatprep.subr.mxu0 0.0
  %2170 = vmatpush1.msra.mxu0 0.0
  %2171 = vmatprep.subr.mxu0 0.0
  %2172 = vmatpush1.msra.mxu0 0.0
  %2173 = vmatprep.subr.mxu0 0.0
  %2174 = vmatpush1.msra.mxu0 0.0
  %2175 = vmatprep.subr.mxu0 0.0
  %2176 = vmatpush1.msra.mxu0 0.0
  %2177 = vmatprep.subr.mxu0 0.0
  %2178 = vmatpush1.msra.mxu0 0.0
  %2179 = vmatprep.subr.mxu0 0.0
  %2180 = vmatpush1.msra.mxu0 0.0
  %2181 = vmatprep.subr.mxu0 0.0
  %2182 = vmatpush1.msra.mxu0 0.0
  %2183 = vmatprep.subr.mxu0 0.0
  %2184 = vmatpush1.msra.mxu0 0.0
  %2185 = vmatprep.subr.mxu0 0.0
  %2186 = vmatpush1.msra.mxu0 0.0
  %2187 = vmatprep.subr.mxu0 0.0
  %2188 = vmatpush1.msra.mxu0 0.0
  %2189 = vmatprep.subr.mxu0 0.0
  %2190 = vmatpush1.msra.mxu0 0.0
  %2191 = vmatprep.subr.mxu0 0.0
  %2192 = vmatpush1.msra.mxu0 0.0
  %2193 = vmatprep.subr.mxu0 0.0
  %2194 = vmatpush1.msra.mxu0 0.0
  %2195 = vmatprep.subr.mxu0 0.0
  %2196 = vmatpush1.msra.mxu0 0.0
  %2197 = vmatprep.subr.mxu0 0.0
  %2198 = vmatpush1.msra.mxu0 0.0
  %2199 = vmatprep.subr.mxu0 0.0
  %2200 = vmatpush1.msra.mxu0 0.0
  %2201 = vmatprep.subr.mxu0 0.0
  %2202 = vmatpush1.msra.mxu0 0.0
  %2203 = vmatprep.subr.mxu0 0.0
  %2204 = vmatpush1.msra.mxu0 0.0
  %2205 = vmatprep.subr.mxu0 0.0
  %2206 = vmatpush1.msra.mxu0 0.0
  %2207 = vmatprep.subr.mxu0 0.0
  %2208 = vmatpush1.msra.mxu0 0.0
  %2209 = vmatprep.subr.mxu0 0.0
  %2210 = vmatpush1.msra.mxu0 0.0
  %2211 = vmatprep.subr.mxu0 0.0
  %2212 = vmatpush1.msra.mxu0 0.0
  %2213 = vmatprep.subr.mxu0 0.0
  %2214 = vmatpush1.msra.mxu0 0.0
  %2215 = vmatprep.mubr.f32.mxu0 0.0
  %2216 = vmatmul.mubr.f32.gmra.mrb[0].mxu0 %v2149
  %v2217 = vpop.f32.mrb[0].mxu0
  %v2218 = vadd.f32 0.0, %v2217
  %v2219 = vpop.f32.mrb[0].mxu0
  %2220 = vdwg.mxu0
  %v2221 = vld [vmem:[%s2 + $0x6] sm:$0x1]
  %v2222 = vld [vmem:[%s2 + $0x7] sm:$0x1]
  %v2223 = vlaneseq
  %v2224 = vshrl.u32 %v2223, 7
  %v2225 = vsub.s32 0, %v2224
  %v2226 = vrot.slane %v2218, %v2225
  %v2227 = vsub.f32 %v2218, %v2226
  %v2228 = vmul.f32 %v2227, %v2227
  %2230 = vrot.lane.b32.xlu0 %v2228, 16
  %v2231 = vpop.permute.xlu0 %2230
  %vm2233 = vcmask 130048
  %v2234 = vsel %vm2233, %v2227, %v2231
  %vm2235 = vcmask 254976
  %v2236 = vsel %vm2235, %v2234, 0.0
  %v2237 = vrot.slane %v2236, 4
  %v2238 = vadd.f32 %v2236, %v2237
  %v2239 = vrot.slane %v2238, 2
  %v2240 = vadd.f32 %v2238, %v2239
  %v2241 = vrot.slane %v2240, 1
  %v2242 = vadd.f32 %v2240, %v2241
  %v2243 = vmul.f32 %v2242, %v1838
  %v2244 = vadd.f32 %v2243, %v2218
  %v2245 = vmul.f32 %v2243, %v2243
  %2247 = vrot.lane.b32.xlu0 %v2245, 16
  %v2248 = vpop.permute.xlu0 %2247
  %v2250 = vsub.f32 %v2243, %v2248
  %v2251 = vmax.f32 %v2250, 0.0
  %v2252 = vlaneseq
  %v2253 = vshrl.u32 %v2252, 7
  %v2254 = vsub.s32 0, %v2253
  %v2255 = vrot.slane %v2244, %v2254
  %v2256 = vsub.f32 %v2218, %v2255
  %v2257 = vadd.f32 %v2251, 1e-05
  %v2258 = vrsqrt.pop %v2257
  %v2259 = vlaneseq
  %v2260 = vshrl.u32 %v2259, 7
  %v2261 = vsub.s32 0, %v2260
  %v2262 = vrot.slane %v2258, %v2261
  %2264 = vrot.lane.b32.xlu0 %v2262, 112
  %v2265 = vpop.permute.xlu0 %2264
  %v2267 = vmul.f32 %v2256, %v2265
  %v2268 = vlaneseq
  %v2269 = vshrl.u32 %v2268, 7
  %v2270 = vsub.s32 0, %v2269
  %v2271 = vrot.slane %v2221, %v2270
  %v2272 = vmul.f32 %v2267, %v2271
  %v2273 = vlaneseq
  %v2274 = vshrl.u32 %v2273, 7
  %v2275 = vsub.s32 0, %v2274
  %v2276 = vrot.slane %v2222, %v2275
  %v2277 = vadd.f32 %v2272, %v2276
  %v2278 = vmax.f32 %v2277, 0.0
  %v2279 = vld [vmem:[%s1 + $0x100] sm:$0xff]
  %v2280 = vld [vmem:[%s1 + $0x108] sm:$0xff]
  %v2281 = vld [vmem:[%s2 + $0x8] sm:$0x1]
  %v2282 = vlaneseq
  %v2283 = vshrl.u32 %v2282, 7
  %v2284 = vsub.s32 0, %v2283
  %v2285 = vrot.slane %v2281, %v2284
  %v2287 = vsel %vm2233, %v2278, 0
  %2289 = vmatprep.subr.mxu0 0.0
  %2290 = vmatpush1.msra.mxu0 %v2279
  %2291 = vmatprep.subr.mxu0 0.0
  %2292 = vmatpush1.msra.mxu0 %v2280
  %2293 = vmatprep.subr.mxu0 0.0
  %2294 = vmatpush1.msra.mxu0 0.0
  %2295 = vmatprep.subr.mxu0 0.0
  %2296 = vmatpush1.msra.mxu0 0.0
  %2297 = vmatprep.subr.mxu0 0.0
  %2298 = vmatpush1.msra.mxu0 0.0
  %2299 = vmatprep.subr.mxu0 0.0
  %2300 = vmatpush1.msra.mxu0 0.0
  %2301 = vmatprep.subr.mxu0 0.0
  %2302 = vmatpush1.msra.mxu0 0.0
  %2303 = vmatprep.subr.mxu0 0.0
  %2304 = vmatpush1.msra.mxu0 0.0
  %2305 = vmatprep.subr.mxu0 0.0
  %2306 = vmatpush1.msra.mxu0 0.0
  %2307 = vmatprep.subr.mxu0 0.0
  %2308 = vmatpush1.msra.mxu0 0.0
  %2309 = vmatprep.subr.mxu0 0.0
  %2310 = vmatpush1.msra.mxu0 0.0
  %2311 = vmatprep.subr.mxu0 0.0
  %2312 = vmatpush1.msra.mxu0 0.0
  %2313 = vmatprep.subr.mxu0 0.0
  %2314 = vmatpush1.msra.mxu0 0.0
  %2315 = vmatprep.subr.mxu0 0.0
  %2316 = vmatpush1.msra.mxu0 0.0
  %2317 = vmatprep.subr.mxu0 0.0
  %2318 = vmatpush1.msra.mxu0 0.0
  %2319 = vmatprep.subr.mxu0 0.0
  %2320 = vmatpush1.msra.mxu0 0.0
  %2321 = vmatprep.subr.mxu0 0.0
  %2322 = vmatpush1.msra.mxu0 0.0
  %2323 = vmatprep.subr.mxu0 0.0
  %2324 = vmatpush1.msra.mxu0 0.0
  %2325 = vmatprep.subr.mxu0 0.0
  %2326 = vmatpush1.msra.mxu0 0.0
  %2327 = vmatprep.subr.mxu0 0.0
  %2328 = vmatpush1.msra.mxu0 0.0
  %2329 = vmatprep.subr.mxu0 0.0
  %2330 = vmatpush1.msra.mxu0 0.0
  %2331 = vmatprep.subr.mxu0 0.0
  %2332 = vmatpush1.msra.mxu0 0.0
  %2333 = vmatprep.subr.mxu0 0.0
  %2334 = vmatpush1.msra.mxu0 0.0
  %2335 = vmatprep.subr.mxu0 0.0
  %2336 = vmatpush1.msra.mxu0 0.0
  %2337 = vmatprep.subr.mxu0 0.0
  %2338 = vmatpush1.msra.mxu0 0.0
  %2339 = vmatprep.subr.mxu0 0.0
  %2340 = vmatpush1.msra.mxu0 0.0
  %2341 = vmatprep.subr.mxu0 0.0
  %2342 = vmatpush1.msra.mxu0 0.0
  %2343 = vmatprep.subr.mxu0 0.0
  %2344 = vmatpush1.msra.mxu0 0.0
  %2345 = vmatprep.subr.mxu0 0.0
  %2346 = vmatpush1.msra.mxu0 0.0
  %2347 = vmatprep.subr.mxu0 0.0
  %2348 = vmatpush1.msra.mxu0 0.0
  %2349 = vmatprep.subr.mxu0 0.0
  %2350 = vmatpush1.msra.mxu0 0.0
  %2351 = vmatprep.subr.mxu0 0.0
  %2352 = vmatpush1.msra.mxu0 0.0
  %2353 = vmatprep.mubr.f32.mxu0 0.0
  %2354 = vmatmul.mubr.f32.gmra.mrb[0].mxu0 %v2287
  %v2355 = vpop.f32.mrb[0].mxu0
  %v2356 = vadd.f32 %v2285, %v2355
  %v2357 = vpop.f32.mrb[0].mxu0
  %2358 = vdwg.mxu0
  %2359 = vst [vmem:[%s3] sm:$0x3f] 0.0
  %vm2360 = vcmask 517120
  %2361 = vst.msk [vmem:[%s3] sm:$0x3] %vm2360, %v2356
  %2362 = vst.msk [vmem:[%s3 + $0x2] sm:$0x3] %vm2360, %v2139
  %v2365 = vunpack.c.l.s4 1983009808
  %v2366 = vunpack.c.0.s8 %v2365
  %v2367 = vlaneseq
  %v2368 = vshrl.u32 %v2367, 7
  %v2369 = vsub.s32 %v2366, %v2368
  %v2370 = vrot.slane %v2094, %v2369
  %2371 = vrot.lane.b32.xlu0 %v2370, 64
  %v2372 = vpop.permute.xlu0 %2371
  %vm2374 = vcmask 74752
  %2375 = vst.msk [vmem:[%s3 + $0x4] sm:$0x3] %vm2374, %v2372
  // Predicated region
  $region14: #{simsiam_v2ce_forward.1} parent=0 // pred_check
    _
  $region15: #{simsiam_v2ce_forward.1} parent=0 // pred_check_branch
    %2377 = sbr.rel (0) target = $region17
  $region16: #{simsiam_v2ce_forward.1} parent=0 // pred_region
    _
  $region17: #{simsiam_v2ce_forward.1} parent=0 // pred_fallthru
    _
  // Predicated region
  $region18: #{simsiam_v2ce_forward.1} parent=0 // pred_check
    _
  $region19: #{simsiam_v2ce_forward.1} parent=0 // pred_check_branch
    %2379 = sbr.rel (0) target = $region21
  $region20: #{simsiam_v2ce_forward.1} parent=0 // pred_region
    _
  $region21: #{simsiam_v2ce_forward.1} parent=0 // pred_fallthru
    _

</llo_original>
